<compile_context>
chip_gen: v6e
topology: v6e:2x2x1
jax: 0.10.0
libtpu: 0.0.40
codegen_flags: <defaults>
</compile_context>

<pallas_src>
import jax
import jax.numpy as jnp
from jax import lax
from jax.experimental import pallas as pl
from jax.experimental.pallas import tpu as pltpu


def bn_relu_conv_kernel(x_ref, gamma_ref, beta_ref, w_ref, o_ref):
    # x_ref:     (Cin, P)   contiguous NCHW activations (N == 1)
    # gamma_ref: (Cin, 1)
    # beta_ref:  (Cin, 1)
    # w_ref:     (Cout, Cin)  -- PyTorch conv weight, no transpose needed
    # o_ref:     (Cout, P)
    x = x_ref[...]                                   # f32
    inv_p = jnp.float32(1.0 / x.shape[1])

    # Per-channel batch stats over the spatial axis (biased variance, two-pass).
    mean = jnp.sum(x, axis=1, keepdims=True) * inv_p          # (Cin, 1)
    xc = x - mean
    var = jnp.sum(xc * xc, axis=1, keepdims=True) * inv_p     # (Cin, 1)

    # Fold BN affine into one scale + shift, then ReLU.
    scale = gamma_ref[...] * lax.rsqrt(var + 1e-5)            # (Cin, 1)
    y = jnp.maximum(xc * scale + beta_ref[...], 0.0)          # (Cin, P)

    # 1x1 conv == matmul on the MXU: (Cout, Cin) @ (Cin, P) -> (Cout, P).
    o_ref[...] = jnp.dot(
        w_ref[...], y, preferred_element_type=jnp.float32
    ).astype(o_ref.dtype)


def bn_relu_conv1x1(x_nchw, gamma, beta, conv_weight):
    """x_nchw: (N, Cin, H, W); conv_weight: (Cout, Cin, 1, 1) (PyTorch layout)."""
    N, Cin, H, W = x_nchw.shape
    Cout = conv_weight.shape[0]
    P = N * H * W

    if N == 1:
        # Pure metadata reshape — zero data movement.
        x_cp = x_nchw.reshape(Cin, P)
    else:
        # General fallback (spec uses N == 1).
        x_cp = jnp.transpose(x_nchw, (1, 0, 2, 3)).reshape(Cin, P)

    g = gamma.reshape(Cin, 1)
    b = beta.reshape(Cin, 1)
    w = conv_weight.reshape(Cout, Cin)               # no transpose needed

    vmem = pl.BlockSpec(memory_space=pltpu.MemorySpace.VMEM)
    out_cp = pl.pallas_call(
        bn_relu_conv_kernel,
        out_shape=jax.ShapeDtypeStruct((Cout, P), x_nchw.dtype),
        in_specs=[vmem, vmem, vmem, vmem],
        out_specs=vmem,
    )(x_cp, g, b, w)

    if N == 1:
        return out_cp.reshape(1, Cout, H, W)         # metadata reshape only
    return jnp.transpose(out_cp.reshape(Cout, N, H, W), (1, 0, 2, 3))


if __name__ == "__main__":
    key = jax.random.PRNGKey(0)
    k_x, k_w, k_g, k_b = jax.random.split(key, 4)

    N, Cin, H, W, Cout = 1, 640, 7, 7, 128

    x = jax.random.normal(k_x, (N, Cin, H, W), dtype=jnp.float32)

    # Non-trivial affine params to exercise the scale/shift fold.
    gamma = jax.random.uniform(k_g, (Cin,), dtype=jnp.float32, minval=0.5, maxval=1.5)
    beta = 0.1 * jax.random.normal(k_b, (Cin,), dtype=jnp.float32)

    fan_in = Cin  # 1x1 kernel
    bound = (1.0 / fan_in) ** 0.5
    conv_w = jax.random.uniform(
        k_w, (Cout, Cin, 1, 1), dtype=jnp.float32, minval=-bound, maxval=bound
    )

    out = bn_relu_conv1x1(x, gamma, beta, conv_w)
    jax.block_until_ready(out)

    assert out.shape == (N, Cout, H, W), out.shape

    # Cross-check against a plain-JAX reference computed in the *original*
    # channels-last formulation (verifies the layout change is semantics-preserving).
    xf = jnp.transpose(x, (0, 2, 3, 1)).reshape(-1, Cin)        # (P, Cin)
    mean = jnp.mean(xf, axis=0, keepdims=True)
    var = jnp.mean((xf - mean) ** 2, axis=0, keepdims=True)
    ref = jnp.maximum((xf - mean) * lax.rsqrt(var + 1e-5) * gamma + beta, 0.0)
    ref = ref @ jnp.transpose(conv_w.reshape(Cout, Cin), (1, 0))
    ref = jnp.transpose(ref.reshape(N, H, W, Cout), (0, 3, 1, 2))
    assert jnp.allclose(out, ref, atol=1e-4, rtol=1e-4)

    print("KERNEL_OK")
</pallas_src>

<mosaic_0001>
module attributes {stable_mosaic.version = 11 : i64} {
  func.func @bn_relu_conv_kernel(%arg0: memref<640x49xf32, #tpu.memory_space<vmem>>, %arg1: memref<640x1xf32, #tpu.memory_space<vmem>>, %arg2: memref<640x1xf32, #tpu.memory_space<vmem>>, %arg3: memref<128x640xf32, #tpu.memory_space<vmem>>, %arg4: memref<128x49xf32, #tpu.memory_space<vmem>>) attributes {dimension_semantics = [], scalar_prefetch = 0 : i64, scratch_operands = 0 : i64, tpu.core_type = #tpu.core_type<tc>} {
    %c0 = arith.constant 0 : index
    %c0_0 = arith.constant 0 : index
    %0 = vector.load %arg0[%c0, %c0_0] : memref<640x49xf32, #tpu.memory_space<vmem>>, vector<640x49xf32>
    %cst = arith.constant dense<0.000000e+00> : vector<640xf32>
    %1 = vector.multi_reduction <add>, %0, %cst [1] : vector<640x49xf32> to vector<640xf32>
    %2 = vector.shape_cast %1 : vector<640xf32> to vector<640x1xf32>
    %cst_1 = arith.constant 0.0204081628 : f32
    %3 = vector.broadcast %cst_1 : f32 to vector<640x1xf32>
    %4 = arith.mulf %2, %3 : vector<640x1xf32>
    %5 = vector.broadcast %4 : vector<640x1xf32> to vector<640x49xf32>
    %6 = arith.subf %0, %5 : vector<640x49xf32>
    %7 = arith.mulf %6, %6 : vector<640x49xf32>
    %cst_2 = arith.constant dense<0.000000e+00> : vector<640xf32>
    %8 = vector.multi_reduction <add>, %7, %cst_2 [1] : vector<640x49xf32> to vector<640xf32>
    %9 = vector.shape_cast %8 : vector<640xf32> to vector<640x1xf32>
    %cst_3 = arith.constant 0.0204081628 : f32
    %10 = vector.broadcast %cst_3 : f32 to vector<640x1xf32>
    %11 = arith.mulf %9, %10 : vector<640x1xf32>
    %c0_4 = arith.constant 0 : index
    %c0_5 = arith.constant 0 : index
    %12 = vector.load %arg1[%c0_4, %c0_5] : memref<640x1xf32, #tpu.memory_space<vmem>>, vector<640x1xf32>
    %cst_6 = arith.constant 9.99999974E-6 : f32
    %13 = vector.broadcast %cst_6 : f32 to vector<640x1xf32>
    %14 = arith.addf %11, %13 : vector<640x1xf32>
    %15 = math.rsqrt %14 : vector<640x1xf32>
    %16 = arith.mulf %12, %15 : vector<640x1xf32>
    %17 = vector.broadcast %16 : vector<640x1xf32> to vector<640x49xf32>
    %18 = arith.mulf %6, %17 : vector<640x49xf32>
    %c0_7 = arith.constant 0 : index
    %c0_8 = arith.constant 0 : index
    %19 = vector.load %arg2[%c0_7, %c0_8] : memref<640x1xf32, #tpu.memory_space<vmem>>, vector<640x1xf32>
    %20 = vector.broadcast %19 : vector<640x1xf32> to vector<640x49xf32>
    %21 = arith.addf %18, %20 : vector<640x49xf32>
    %cst_9 = arith.constant 0.000000e+00 : f32
    %22 = vector.broadcast %cst_9 : f32 to vector<640x49xf32>
    %23 = arith.maximumf %21, %22 : vector<640x49xf32>
    %c0_10 = arith.constant 0 : index
    %c0_11 = arith.constant 0 : index
    %24 = vector.load %arg3[%c0_10, %c0_11] : memref<128x640xf32, #tpu.memory_space<vmem>>, vector<128x640xf32>
    %cst_12 = arith.constant dense<0.000000e+00> : vector<128x49xf32>
    %25 = tpu.matmul %24, %23, %cst_12 {dimension_numbers = #tpu.dot_dimension_numbers<[1], [0], [0], [1], [0, 0, 1, 1], [], []>} : vector<128x640xf32>, vector<640x49xf32>, vector<128x49xf32> -> vector<128x49xf32>
    %c0_13 = arith.constant 0 : index
    %c0_14 = arith.constant 0 : index
    %26 = vector.load %arg4[%c0_13, %c0_14] : memref<128x49xf32, #tpu.memory_space<vmem>>, vector<128x49xf32>
    tpu.vector_store %arg4[%c0_13, %c0_14], %25 {strides = array<i32>} : memref<128x49xf32, #tpu.memory_space<vmem>>, vector<128x49xf32>,
    return
  }
}

</mosaic_0001>

<llo_original>
// kernel: tpu_custom_call.1
$region0: #{tpu_custom_call.1}
  #allocation0 [shape = 'u32[]', space=smem, size = 0x4, offset = 0x4, fixed_abs, tag = 'smem constant byte address 0x4 - core index']
  #allocation1 [shape = 'u32[144,128]{1,0:T(1,128)}', space=vmem, size = 0x12000, scoped, tag = 'internal scratch']
  %s0 = inlined_call_operand.vmem [shape: f32[640,49], index: 0, kind: input, shape index: {}]
  %s1 = inlined_call_operand.vmem [shape: f32[640,1], index: 1, kind: input, shape index: {}]
  %s2 = inlined_call_operand.vmem [shape: f32[640,1], index: 2, kind: input, shape index: {}]
  %s3 = inlined_call_operand.vmem [shape: f32[128,640], index: 3, kind: input, shape index: {}]
  %s4 = inlined_call_operand.vmem [shape: f32[128,49], index: 4, kind: output, shape index: {}]
  %s5 = sld [smem:[#allocation0]]
  $region26: #{tpu_custom_call.1} parent=0
    _
  %s7 = ssub.s32 1, %s5
  %s8 = scalar_select 0, %s7, %s5
  // Predicated region
  $region2: #{tpu_custom_call.1} parent=0 // pred_check
    _
  $region3: #{tpu_custom_call.1} parent=0 // pred_check_branch
    %10 = sbr.rel (0) target = $region5
  $region4: #{tpu_custom_call.1} parent=0 // pred_region
    _
  $region5: #{tpu_custom_call.1} parent=0 // pred_fallthru
    _
  // Predicated region
  $region6: #{tpu_custom_call.1} parent=0 // pred_check
    _
  $region7: #{tpu_custom_call.1} parent=0 // pred_check_branch
    %12 = sbr.rel (0) target = $region9
  $region8: #{tpu_custom_call.1} parent=0 // pred_region
    _
  $region9: #{tpu_custom_call.1} parent=0 // pred_fallthru
    _
  // Predicated region
  $region10: #{tpu_custom_call.1} parent=0 // pred_check
    _
  $region11: #{tpu_custom_call.1} parent=0 // pred_check_branch
    %14 = sbr.rel (0) target = $region13
  $region12: #{tpu_custom_call.1} parent=0 // pred_region
    _
  $region13: #{tpu_custom_call.1} parent=0 // pred_fallthru
    _
  // Predicated region
  $region14: #{tpu_custom_call.1} parent=0 // pred_check
    _
  $region15: #{tpu_custom_call.1} parent=0 // pred_check_branch
    %16 = sbr.rel (0) target = $region17
  $region16: #{tpu_custom_call.1} parent=0 // pred_region
    _
  $region17: #{tpu_custom_call.1} parent=0 // pred_fallthru
    _
  %v17 = vld [vmem:[%s0] sm:$0xff]
  %v18 = vld [vmem:[%s0 + $0x8] sm:$0xff]
  %v19 = vld [vmem:[%s0 + $0x10] sm:$0xff]
  %v20 = vld [vmem:[%s0 + $0x18] sm:$0xff]
  %v21 = vld [vmem:[%s0 + $0x20] sm:$0xff]
  %v22 = vld [vmem:[%s0 + $0x28] sm:$0xff]
  %v23 = vld [vmem:[%s0 + $0x30] sm:$0xff]
  %v24 = vld [vmem:[%s0 + $0x38] sm:$0xff]
  %v25 = vld [vmem:[%s0 + $0x40] sm:$0xff]
  %v26 = vld [vmem:[%s0 + $0x48] sm:$0xff]
  %v27 = vld [vmem:[%s0 + $0x50] sm:$0xff]
  %v28 = vld [vmem:[%s0 + $0x58] sm:$0xff]
  %v29 = vld [vmem:[%s0 + $0x60] sm:$0xff]
  %v30 = vld [vmem:[%s0 + $0x68] sm:$0xff]
  %v31 = vld [vmem:[%s0 + $0x70] sm:$0xff]
  %v32 = vld [vmem:[%s0 + $0x78] sm:$0xff]
  %v33 = vld [vmem:[%s0 + $0x80] sm:$0xff]
  %v34 = vld [vmem:[%s0 + $0x88] sm:$0xff]
  %v35 = vld [vmem:[%s0 + $0x90] sm:$0xff]
  %v36 = vld [vmem:[%s0 + $0x98] sm:$0xff]
  %v37 = vld [vmem:[%s0 + $0xa0] sm:$0xff]
  %v38 = vld [vmem:[%s0 + $0xa8] sm:$0xff]
  %v39 = vld [vmem:[%s0 + $0xb0] sm:$0xff]
  %v40 = vld [vmem:[%s0 + $0xb8] sm:$0xff]
  %v41 = vld [vmem:[%s0 + $0xc0] sm:$0xff]
  %v42 = vld [vmem:[%s0 + $0xc8] sm:$0xff]
  %v43 = vld [vmem:[%s0 + $0xd0] sm:$0xff]
  %v44 = vld [vmem:[%s0 + $0xd8] sm:$0xff]
  %v45 = vld [vmem:[%s0 + $0xe0] sm:$0xff]
  %v46 = vld [vmem:[%s0 + $0xe8] sm:$0xff]
  %v47 = vld [vmem:[%s0 + $0xf0] sm:$0xff]
  %v48 = vld [vmem:[%s0 + $0xf8] sm:$0xff]
  %v49 = vld [vmem:[%s0 + $0x100] sm:$0xff]
  %v50 = vld [vmem:[%s0 + $0x108] sm:$0xff]
  %v51 = vld [vmem:[%s0 + $0x110] sm:$0xff]
  %v52 = vld [vmem:[%s0 + $0x118] sm:$0xff]
  %v53 = vld [vmem:[%s0 + $0x120] sm:$0xff]
  %v54 = vld [vmem:[%s0 + $0x128] sm:$0xff]
  %v55 = vld [vmem:[%s0 + $0x130] sm:$0xff]
  %v56 = vld [vmem:[%s0 + $0x138] sm:$0xff]
  %v57 = vld [vmem:[%s0 + $0x140] sm:$0xff]
  %v58 = vld [vmem:[%s0 + $0x148] sm:$0xff]
  %v59 = vld [vmem:[%s0 + $0x150] sm:$0xff]
  %v60 = vld [vmem:[%s0 + $0x158] sm:$0xff]
  %v61 = vld [vmem:[%s0 + $0x160] sm:$0xff]
  %v62 = vld [vmem:[%s0 + $0x168] sm:$0xff]
  %v63 = vld [vmem:[%s0 + $0x170] sm:$0xff]
  %v64 = vld [vmem:[%s0 + $0x178] sm:$0xff]
  %v65 = vld [vmem:[%s0 + $0x180] sm:$0xff]
  %v66 = vld [vmem:[%s0 + $0x188] sm:$0xff]
  %v67 = vld [vmem:[%s0 + $0x190] sm:$0xff]
  %v68 = vld [vmem:[%s0 + $0x198] sm:$0xff]
  %v69 = vld [vmem:[%s0 + $0x1a0] sm:$0xff]
  %v70 = vld [vmem:[%s0 + $0x1a8] sm:$0xff]
  %v71 = vld [vmem:[%s0 + $0x1b0] sm:$0xff]
  %v72 = vld [vmem:[%s0 + $0x1b8] sm:$0xff]
  %v73 = vld [vmem:[%s0 + $0x1c0] sm:$0xff]
  %v74 = vld [vmem:[%s0 + $0x1c8] sm:$0xff]
  %v75 = vld [vmem:[%s0 + $0x1d0] sm:$0xff]
  %v76 = vld [vmem:[%s0 + $0x1d8] sm:$0xff]
  %v77 = vld [vmem:[%s0 + $0x1e0] sm:$0xff]
  %v78 = vld [vmem:[%s0 + $0x1e8] sm:$0xff]
  %v79 = vld [vmem:[%s0 + $0x1f0] sm:$0xff]
  %v80 = vld [vmem:[%s0 + $0x1f8] sm:$0xff]
  %v81 = vld [vmem:[%s0 + $0x200] sm:$0xff]
  %v82 = vld [vmem:[%s0 + $0x208] sm:$0xff]
  %v83 = vld [vmem:[%s0 + $0x210] sm:$0xff]
  %v84 = vld [vmem:[%s0 + $0x218] sm:$0xff]
  %v85 = vld [vmem:[%s0 + $0x220] sm:$0xff]
  %v86 = vld [vmem:[%s0 + $0x228] sm:$0xff]
  %v87 = vld [vmem:[%s0 + $0x230] sm:$0xff]
  %v88 = vld [vmem:[%s0 + $0x238] sm:$0xff]
  %v89 = vld [vmem:[%s0 + $0x240] sm:$0xff]
  %v90 = vld [vmem:[%s0 + $0x248] sm:$0xff]
  %v91 = vld [vmem:[%s0 + $0x250] sm:$0xff]
  %v92 = vld [vmem:[%s0 + $0x258] sm:$0xff]
  %v93 = vld [vmem:[%s0 + $0x260] sm:$0xff]
  %v94 = vld [vmem:[%s0 + $0x268] sm:$0xff]
  %v95 = vld [vmem:[%s0 + $0x270] sm:$0xff]
  %v96 = vld [vmem:[%s0 + $0x278] sm:$0xff]
  %vm97 = vcmask 400384
  %v98 = vsel %vm97, %v17, 0.0
  %99 = vadd.xlane.f32.xlu0 %v98
  %v100 = vpop.xlane.xlu0 %99
  %v101 = vsel %vm97, %v18, 0.0
  %102 = vadd.xlane.f32.xlu0 %v101
  %v103 = vpop.xlane.xlu0 %102
  %v104 = vsel %vm97, %v19, 0.0
  %105 = vadd.xlane.f32.xlu0 %v104
  %v106 = vpop.xlane.xlu0 %105
  %v107 = vsel %vm97, %v20, 0.0
  %108 = vadd.xlane.f32.xlu0 %v107
  %v109 = vpop.xlane.xlu0 %108
  %v110 = vsel %vm97, %v21, 0.0
  %111 = vadd.xlane.f32.xlu0 %v110
  %v112 = vpop.xlane.xlu0 %111
  %v113 = vsel %vm97, %v22, 0.0
  %114 = vadd.xlane.f32.xlu0 %v113
  %v115 = vpop.xlane.xlu0 %114
  %v116 = vsel %vm97, %v23, 0.0
  %117 = vadd.xlane.f32.xlu0 %v116
  %v118 = vpop.xlane.xlu0 %117
  %v119 = vsel %vm97, %v24, 0.0
  %120 = vadd.xlane.f32.xlu0 %v119
  %v121 = vpop.xlane.xlu0 %120
  %v122 = vsel %vm97, %v25, 0.0
  %123 = vadd.xlane.f32.xlu0 %v122
  %v124 = vpop.xlane.xlu0 %123
  %v125 = vsel %vm97, %v26, 0.0
  %126 = vadd.xlane.f32.xlu0 %v125
  %v127 = vpop.xlane.xlu0 %126
  %v128 = vsel %vm97, %v27, 0.0
  %129 = vadd.xlane.f32.xlu0 %v128
  %v130 = vpop.xlane.xlu0 %129
  %v131 = vsel %vm97, %v28, 0.0
  %132 = vadd.xlane.f32.xlu0 %v131
  %v133 = vpop.xlane.xlu0 %132
  %v134 = vsel %vm97, %v29, 0.0
  %135 = vadd.xlane.f32.xlu0 %v134
  %v136 = vpop.xlane.xlu0 %135
  %v137 = vsel %vm97, %v30, 0.0
  %138 = vadd.xlane.f32.xlu0 %v137
  %v139 = vpop.xlane.xlu0 %138
  %v140 = vsel %vm97, %v31, 0.0
  %141 = vadd.xlane.f32.xlu0 %v140
  %v142 = vpop.xlane.xlu0 %141
  %v143 = vsel %vm97, %v32, 0.0
  %144 = vadd.xlane.f32.xlu0 %v143
  %v145 = vpop.xlane.xlu0 %144
  %v146 = vsel %vm97, %v33, 0.0
  %147 = vadd.xlane.f32.xlu0 %v146
  %v148 = vpop.xlane.xlu0 %147
  %v149 = vsel %vm97, %v34, 0.0
  %150 = vadd.xlane.f32.xlu0 %v149
  %v151 = vpop.xlane.xlu0 %150
  %v152 = vsel %vm97, %v35, 0.0
  %153 = vadd.xlane.f32.xlu0 %v152
  %v154 = vpop.xlane.xlu0 %153
  %v155 = vsel %vm97, %v36, 0.0
  %156 = vadd.xlane.f32.xlu0 %v155
  %v157 = vpop.xlane.xlu0 %156
  %v158 = vsel %vm97, %v37, 0.0
  %159 = vadd.xlane.f32.xlu0 %v158
  %v160 = vpop.xlane.xlu0 %159
  %v161 = vsel %vm97, %v38, 0.0
  %162 = vadd.xlane.f32.xlu0 %v161
  %v163 = vpop.xlane.xlu0 %162
  %v164 = vsel %vm97, %v39, 0.0
  %165 = vadd.xlane.f32.xlu0 %v164
  %v166 = vpop.xlane.xlu0 %165
  %v167 = vsel %vm97, %v40, 0.0
  %168 = vadd.xlane.f32.xlu0 %v167
  %v169 = vpop.xlane.xlu0 %168
  %v170 = vsel %vm97, %v41, 0.0
  %171 = vadd.xlane.f32.xlu0 %v170
  %v172 = vpop.xlane.xlu0 %171
  %v173 = vsel %vm97, %v42, 0.0
  %174 = vadd.xlane.f32.xlu0 %v173
  %v175 = vpop.xlane.xlu0 %174
  %v176 = vsel %vm97, %v43, 0.0
  %177 = vadd.xlane.f32.xlu0 %v176
  %v178 = vpop.xlane.xlu0 %177
  %v179 = vsel %vm97, %v44, 0.0
  %180 = vadd.xlane.f32.xlu0 %v179
  %v181 = vpop.xlane.xlu0 %180
  %v182 = vsel %vm97, %v45, 0.0
  %183 = vadd.xlane.f32.xlu0 %v182
  %v184 = vpop.xlane.xlu0 %183
  %v185 = vsel %vm97, %v46, 0.0
  %186 = vadd.xlane.f32.xlu0 %v185
  %v187 = vpop.xlane.xlu0 %186
  %v188 = vsel %vm97, %v47, 0.0
  %189 = vadd.xlane.f32.xlu0 %v188
  %v190 = vpop.xlane.xlu0 %189
  %v191 = vsel %vm97, %v48, 0.0
  %192 = vadd.xlane.f32.xlu0 %v191
  %v193 = vpop.xlane.xlu0 %192
  %v194 = vsel %vm97, %v49, 0.0
  %195 = vadd.xlane.f32.xlu0 %v194
  %v196 = vpop.xlane.xlu0 %195
  %v197 = vsel %vm97, %v50, 0.0
  %198 = vadd.xlane.f32.xlu0 %v197
  %v199 = vpop.xlane.xlu0 %198
  %v200 = vsel %vm97, %v51, 0.0
  %201 = vadd.xlane.f32.xlu0 %v200
  %v202 = vpop.xlane.xlu0 %201
  %v203 = vsel %vm97, %v52, 0.0
  %204 = vadd.xlane.f32.xlu0 %v203
  %v205 = vpop.xlane.xlu0 %204
  %v206 = vsel %vm97, %v53, 0.0
  %207 = vadd.xlane.f32.xlu0 %v206
  %v208 = vpop.xlane.xlu0 %207
  %v209 = vsel %vm97, %v54, 0.0
  %210 = vadd.xlane.f32.xlu0 %v209
  %v211 = vpop.xlane.xlu0 %210
  %v212 = vsel %vm97, %v55, 0.0
  %213 = vadd.xlane.f32.xlu0 %v212
  %v214 = vpop.xlane.xlu0 %213
  %v215 = vsel %vm97, %v56, 0.0
  %216 = vadd.xlane.f32.xlu0 %v215
  %v217 = vpop.xlane.xlu0 %216
  %v218 = vsel %vm97, %v57, 0.0
  %219 = vadd.xlane.f32.xlu0 %v218
  %v220 = vpop.xlane.xlu0 %219
  %v221 = vsel %vm97, %v58, 0.0
  %222 = vadd.xlane.f32.xlu0 %v221
  %v223 = vpop.xlane.xlu0 %222
  %v224 = vsel %vm97, %v59, 0.0
  %225 = vadd.xlane.f32.xlu0 %v224
  %v226 = vpop.xlane.xlu0 %225
  %v227 = vsel %vm97, %v60, 0.0
  %228 = vadd.xlane.f32.xlu0 %v227
  %v229 = vpop.xlane.xlu0 %228
  %v230 = vsel %vm97, %v61, 0.0
  %231 = vadd.xlane.f32.xlu0 %v230
  %v232 = vpop.xlane.xlu0 %231
  %v233 = vsel %vm97, %v62, 0.0
  %234 = vadd.xlane.f32.xlu0 %v233
  %v235 = vpop.xlane.xlu0 %234
  %v236 = vsel %vm97, %v63, 0.0
  %237 = vadd.xlane.f32.xlu0 %v236
  %v238 = vpop.xlane.xlu0 %237
  %v239 = vsel %vm97, %v64, 0.0
  %240 = vadd.xlane.f32.xlu0 %v239
  %v241 = vpop.xlane.xlu0 %240
  %v242 = vsel %vm97, %v65, 0.0
  %243 = vadd.xlane.f32.xlu0 %v242
  %v244 = vpop.xlane.xlu0 %243
  %v245 = vsel %vm97, %v66, 0.0
  %246 = vadd.xlane.f32.xlu0 %v245
  %v247 = vpop.xlane.xlu0 %246
  %v248 = vsel %vm97, %v67, 0.0
  %249 = vadd.xlane.f32.xlu0 %v248
  %v250 = vpop.xlane.xlu0 %249
  %v251 = vsel %vm97, %v68, 0.0
  %252 = vadd.xlane.f32.xlu0 %v251
  %v253 = vpop.xlane.xlu0 %252
  %v254 = vsel %vm97, %v69, 0.0
  %255 = vadd.xlane.f32.xlu0 %v254
  %v256 = vpop.xlane.xlu0 %255
  %v257 = vsel %vm97, %v70, 0.0
  %258 = vadd.xlane.f32.xlu0 %v257
  %v259 = vpop.xlane.xlu0 %258
  %v260 = vsel %vm97, %v71, 0.0
  %261 = vadd.xlane.f32.xlu0 %v260
  %v262 = vpop.xlane.xlu0 %261
  %v263 = vsel %vm97, %v72, 0.0
  %264 = vadd.xlane.f32.xlu0 %v263
  %v265 = vpop.xlane.xlu0 %264
  %v266 = vsel %vm97, %v73, 0.0
  %267 = vadd.xlane.f32.xlu0 %v266
  %v268 = vpop.xlane.xlu0 %267
  %v269 = vsel %vm97, %v74, 0.0
  %270 = vadd.xlane.f32.xlu0 %v269
  %v271 = vpop.xlane.xlu0 %270
  %v272 = vsel %vm97, %v75, 0.0
  %273 = vadd.xlane.f32.xlu0 %v272
  %v274 = vpop.xlane.xlu0 %273
  %v275 = vsel %vm97, %v76, 0.0
  %276 = vadd.xlane.f32.xlu0 %v275
  %v277 = vpop.xlane.xlu0 %276
  %v278 = vsel %vm97, %v77, 0.0
  %279 = vadd.xlane.f32.xlu0 %v278
  %v280 = vpop.xlane.xlu0 %279
  %v281 = vsel %vm97, %v78, 0.0
  %282 = vadd.xlane.f32.xlu0 %v281
  %v283 = vpop.xlane.xlu0 %282
  %v284 = vsel %vm97, %v79, 0.0
  %285 = vadd.xlane.f32.xlu0 %v284
  %v286 = vpop.xlane.xlu0 %285
  %v287 = vsel %vm97, %v80, 0.0
  %288 = vadd.xlane.f32.xlu0 %v287
  %v289 = vpop.xlane.xlu0 %288
  %v290 = vsel %vm97, %v81, 0.0
  %291 = vadd.xlane.f32.xlu0 %v290
  %v292 = vpop.xlane.xlu0 %291
  %v293 = vsel %vm97, %v82, 0.0
  %294 = vadd.xlane.f32.xlu0 %v293
  %v295 = vpop.xlane.xlu0 %294
  %v296 = vsel %vm97, %v83, 0.0
  %297 = vadd.xlane.f32.xlu0 %v296
  %v298 = vpop.xlane.xlu0 %297
  %v299 = vsel %vm97, %v84, 0.0
  %300 = vadd.xlane.f32.xlu0 %v299
  %v301 = vpop.xlane.xlu0 %300
  %v302 = vsel %vm97, %v85, 0.0
  %303 = vadd.xlane.f32.xlu0 %v302
  %v304 = vpop.xlane.xlu0 %303
  %v305 = vsel %vm97, %v86, 0.0
  %306 = vadd.xlane.f32.xlu0 %v305
  %v307 = vpop.xlane.xlu0 %306
  %v308 = vsel %vm97, %v87, 0.0
  %309 = vadd.xlane.f32.xlu0 %v308
  %v310 = vpop.xlane.xlu0 %309
  %v311 = vsel %vm97, %v88, 0.0
  %312 = vadd.xlane.f32.xlu0 %v311
  %v313 = vpop.xlane.xlu0 %312
  %v314 = vsel %vm97, %v89, 0.0
  %315 = vadd.xlane.f32.xlu0 %v314
  %v316 = vpop.xlane.xlu0 %315
  %v317 = vsel %vm97, %v90, 0.0
  %318 = vadd.xlane.f32.xlu0 %v317
  %v319 = vpop.xlane.xlu0 %318
  %v320 = vsel %vm97, %v91, 0.0
  %321 = vadd.xlane.f32.xlu0 %v320
  %v322 = vpop.xlane.xlu0 %321
  %v323 = vsel %vm97, %v92, 0.0
  %324 = vadd.xlane.f32.xlu0 %v323
  %v325 = vpop.xlane.xlu0 %324
  %v326 = vsel %vm97, %v93, 0.0
  %327 = vadd.xlane.f32.xlu0 %v326
  %v328 = vpop.xlane.xlu0 %327
  %v329 = vsel %vm97, %v94, 0.0
  %330 = vadd.xlane.f32.xlu0 %v329
  %v331 = vpop.xlane.xlu0 %330
  %v332 = vsel %vm97, %v95, 0.0
  %333 = vadd.xlane.f32.xlu0 %v332
  %v334 = vpop.xlane.xlu0 %333
  %v335 = vsel %vm97, %v96, 0.0
  %336 = vadd.xlane.f32.xlu0 %v335
  %v337 = vpop.xlane.xlu0 %336
  %v338 = vmul.f32 %v100, 0.020408163
  %v339 = vmul.f32 %v103, 0.020408163
  %v340 = vmul.f32 %v106, 0.020408163
  %v341 = vmul.f32 %v109, 0.020408163
  %v342 = vmul.f32 %v112, 0.020408163
  %v343 = vmul.f32 %v115, 0.020408163
  %v344 = vmul.f32 %v118, 0.020408163
  %v345 = vmul.f32 %v121, 0.020408163
  %v346 = vmul.f32 %v124, 0.020408163
  %v347 = vmul.f32 %v127, 0.020408163
  %v348 = vmul.f32 %v130, 0.020408163
  %v349 = vmul.f32 %v133, 0.020408163
  %v350 = vmul.f32 %v136, 0.020408163
  %v351 = vmul.f32 %v139, 0.020408163
  %v352 = vmul.f32 %v142, 0.020408163
  %v353 = vmul.f32 %v145, 0.020408163
  %v354 = vmul.f32 %v148, 0.020408163
  %v355 = vmul.f32 %v151, 0.020408163
  %v356 = vmul.f32 %v154, 0.020408163
  %v357 = vmul.f32 %v157, 0.020408163
  %v358 = vmul.f32 %v160, 0.020408163
  %v359 = vmul.f32 %v163, 0.020408163
  %v360 = vmul.f32 %v166, 0.020408163
  %v361 = vmul.f32 %v169, 0.020408163
  %v362 = vmul.f32 %v172, 0.020408163
  %v363 = vmul.f32 %v175, 0.020408163
  %v364 = vmul.f32 %v178, 0.020408163
  %v365 = vmul.f32 %v181, 0.020408163
  %v366 = vmul.f32 %v184, 0.020408163
  %v367 = vmul.f32 %v187, 0.020408163
  %v368 = vmul.f32 %v190, 0.020408163
  %v369 = vmul.f32 %v193, 0.020408163
  %v370 = vmul.f32 %v196, 0.020408163
  %v371 = vmul.f32 %v199, 0.020408163
  %v372 = vmul.f32 %v202, 0.020408163
  %v373 = vmul.f32 %v205, 0.020408163
  %v374 = vmul.f32 %v208, 0.020408163
  %v375 = vmul.f32 %v211, 0.020408163
  %v376 = vmul.f32 %v214, 0.020408163
  %v377 = vmul.f32 %v217, 0.020408163
  %v378 = vmul.f32 %v220, 0.020408163
  %v379 = vmul.f32 %v223, 0.020408163
  %v380 = vmul.f32 %v226, 0.020408163
  %v381 = vmul.f32 %v229, 0.020408163
  %v382 = vmul.f32 %v232, 0.020408163
  %v383 = vmul.f32 %v235, 0.020408163
  %v384 = vmul.f32 %v238, 0.020408163
  %v385 = vmul.f32 %v241, 0.020408163
  %v386 = vmul.f32 %v244, 0.020408163
  %v387 = vmul.f32 %v247, 0.020408163
  %v388 = vmul.f32 %v250, 0.020408163
  %v389 = vmul.f32 %v253, 0.020408163
  %v390 = vmul.f32 %v256, 0.020408163
  %v391 = vmul.f32 %v259, 0.020408163
  %v392 = vmul.f32 %v262, 0.020408163
  %v393 = vmul.f32 %v265, 0.020408163
  %v394 = vmul.f32 %v268, 0.020408163
  %v395 = vmul.f32 %v271, 0.020408163
  %v396 = vmul.f32 %v274, 0.020408163
  %v397 = vmul.f32 %v277, 0.020408163
  %v398 = vmul.f32 %v280, 0.020408163
  %v399 = vmul.f32 %v283, 0.020408163
  %v400 = vmul.f32 %v286, 0.020408163
  %v401 = vmul.f32 %v289, 0.020408163
  %v402 = vmul.f32 %v292, 0.020408163
  %v403 = vmul.f32 %v295, 0.020408163
  %v404 = vmul.f32 %v298, 0.020408163
  %v405 = vmul.f32 %v301, 0.020408163
  %v406 = vmul.f32 %v304, 0.020408163
  %v407 = vmul.f32 %v307, 0.020408163
  %v408 = vmul.f32 %v310, 0.020408163
  %v409 = vmul.f32 %v313, 0.020408163
  %v410 = vmul.f32 %v316, 0.020408163
  %v411 = vmul.f32 %v319, 0.020408163
  %v412 = vmul.f32 %v322, 0.020408163
  %v413 = vmul.f32 %v325, 0.020408163
  %v414 = vmul.f32 %v328, 0.020408163
  %v415 = vmul.f32 %v331, 0.020408163
  %v416 = vmul.f32 %v334, 0.020408163
  %v417 = vmul.f32 %v337, 0.020408163
  %v418 = vsub.f32 %v17, %v338
  %v419 = vsub.f32 %v18, %v339
  %v420 = vsub.f32 %v19, %v340
  %v421 = vsub.f32 %v20, %v341
  %v422 = vsub.f32 %v21, %v342
  %v423 = vsub.f32 %v22, %v343
  %v424 = vsub.f32 %v23, %v344
  %v425 = vsub.f32 %v24, %v345
  %v426 = vsub.f32 %v25, %v346
  %v427 = vsub.f32 %v26, %v347
  %v428 = vsub.f32 %v27, %v348
  %v429 = vsub.f32 %v28, %v349
  %v430 = vsub.f32 %v29, %v350
  %v431 = vsub.f32 %v30, %v351
  %v432 = vsub.f32 %v31, %v352
  %v433 = vsub.f32 %v32, %v353
  %v434 = vsub.f32 %v33, %v354
  %v435 = vsub.f32 %v34, %v355
  %v436 = vsub.f32 %v35, %v356
  %v437 = vsub.f32 %v36, %v357
  %v438 = vsub.f32 %v37, %v358
  %v439 = vsub.f32 %v38, %v359
  %v440 = vsub.f32 %v39, %v360
  %v441 = vsub.f32 %v40, %v361
  %v442 = vsub.f32 %v41, %v362
  %v443 = vsub.f32 %v42, %v363
  %v444 = vsub.f32 %v43, %v364
  %v445 = vsub.f32 %v44, %v365
  %v446 = vsub.f32 %v45, %v366
  %v447 = vsub.f32 %v46, %v367
  %v448 = vsub.f32 %v47, %v368
  %v449 = vsub.f32 %v48, %v369
  %v450 = vsub.f32 %v49, %v370
  %v451 = vsub.f32 %v50, %v371
  %v452 = vsub.f32 %v51, %v372
  %v453 = vsub.f32 %v52, %v373
  %v454 = vsub.f32 %v53, %v374
  %v455 = vsub.f32 %v54, %v375
  %v456 = vsub.f32 %v55, %v376
  %v457 = vsub.f32 %v56, %v377
  %v458 = vsub.f32 %v57, %v378
  %v459 = vsub.f32 %v58, %v379
  %v460 = vsub.f32 %v59, %v380
  %v461 = vsub.f32 %v60, %v381
  %v462 = vsub.f32 %v61, %v382
  %v463 = vsub.f32 %v62, %v383
  %v464 = vsub.f32 %v63, %v384
  %v465 = vsub.f32 %v64, %v385
  %v466 = vsub.f32 %v65, %v386
  %v467 = vsub.f32 %v66, %v387
  %v468 = vsub.f32 %v67, %v388
  %v469 = vsub.f32 %v68, %v389
  %v470 = vsub.f32 %v69, %v390
  %v471 = vsub.f32 %v70, %v391
  %v472 = vsub.f32 %v71, %v392
  %v473 = vsub.f32 %v72, %v393
  %v474 = vsub.f32 %v73, %v394
  %v475 = vsub.f32 %v74, %v395
  %v476 = vsub.f32 %v75, %v396
  %v477 = vsub.f32 %v76, %v397
  %v478 = vsub.f32 %v77, %v398
  %v479 = vsub.f32 %v78, %v399
  %v480 = vsub.f32 %v79, %v400
  %v481 = vsub.f32 %v80, %v401
  %v482 = vsub.f32 %v81, %v402
  %v483 = vsub.f32 %v82, %v403
  %v484 = vsub.f32 %v83, %v404
  %v485 = vsub.f32 %v84, %v405
  %v486 = vsub.f32 %v85, %v406
  %v487 = vsub.f32 %v86, %v407
  %v488 = vsub.f32 %v87, %v408
  %v489 = vsub.f32 %v88, %v409
  %v490 = vsub.f32 %v89, %v410
  %v491 = vsub.f32 %v90, %v411
  %v492 = vsub.f32 %v91, %v412
  %v493 = vsub.f32 %v92, %v413
  %v494 = vsub.f32 %v93, %v414
  %v495 = vsub.f32 %v94, %v415
  %v496 = vsub.f32 %v95, %v416
  %v497 = vsub.f32 %v96, %v417
  %v498 = vmul.f32 %v418, %v418
  %v499 = vmul.f32 %v419, %v419
  %v500 = vmul.f32 %v420, %v420
  %v501 = vmul.f32 %v421, %v421
  %v502 = vmul.f32 %v422, %v422
  %v503 = vmul.f32 %v423, %v423
  %v504 = vmul.f32 %v424, %v424
  %v505 = vmul.f32 %v425, %v425
  %v506 = vmul.f32 %v426, %v426
  %v507 = vmul.f32 %v427, %v427
  %v508 = vmul.f32 %v428, %v428
  %v509 = vmul.f32 %v429, %v429
  %v510 = vmul.f32 %v430, %v430
  %v511 = vmul.f32 %v431, %v431
  %v512 = vmul.f32 %v432, %v432
  %v513 = vmul.f32 %v433, %v433
  %v514 = vmul.f32 %v434, %v434
  %v515 = vmul.f32 %v435, %v435
  %v516 = vmul.f32 %v436, %v436
  %v517 = vmul.f32 %v437, %v437
  %v518 = vmul.f32 %v438, %v438
  %v519 = vmul.f32 %v439, %v439
  %v520 = vmul.f32 %v440, %v440
  %v521 = vmul.f32 %v441, %v441
  %v522 = vmul.f32 %v442, %v442
  %v523 = vmul.f32 %v443, %v443
  %v524 = vmul.f32 %v444, %v444
  %v525 = vmul.f32 %v445, %v445
  %v526 = vmul.f32 %v446, %v446
  %v527 = vmul.f32 %v447, %v447
  %v528 = vmul.f32 %v448, %v448
  %v529 = vmul.f32 %v449, %v449
  %v530 = vmul.f32 %v450, %v450
  %v531 = vmul.f32 %v451, %v451
  %v532 = vmul.f32 %v452, %v452
  %v533 = vmul.f32 %v453, %v453
  %v534 = vmul.f32 %v454, %v454
  %v535 = vmul.f32 %v455, %v455
  %v536 = vmul.f32 %v456, %v456
  %v537 = vmul.f32 %v457, %v457
  %v538 = vmul.f32 %v458, %v458
  %v539 = vmul.f32 %v459, %v459
  %v540 = vmul.f32 %v460, %v460
  %v541 = vmul.f32 %v461, %v461
  %v542 = vmul.f32 %v462, %v462
  %v543 = vmul.f32 %v463, %v463
  %v544 = vmul.f32 %v464, %v464
  %v545 = vmul.f32 %v465, %v465
  %v546 = vmul.f32 %v466, %v466
  %v547 = vmul.f32 %v467, %v467
  %v548 = vmul.f32 %v468, %v468
  %v549 = vmul.f32 %v469, %v469
  %v550 = vmul.f32 %v470, %v470
  %v551 = vmul.f32 %v471, %v471
  %v552 = vmul.f32 %v472, %v472
  %v553 = vmul.f32 %v473, %v473
  %v554 = vmul.f32 %v474, %v474
  %v555 = vmul.f32 %v475, %v475
  %v556 = vmul.f32 %v476, %v476
  %v557 = vmul.f32 %v477, %v477
  %v558 = vmul.f32 %v478, %v478
  %v559 = vmul.f32 %v479, %v479
  %v560 = vmul.f32 %v480, %v480
  %v561 = vmul.f32 %v481, %v481
  %v562 = vmul.f32 %v482, %v482
  %v563 = vmul.f32 %v483, %v483
  %v564 = vmul.f32 %v484, %v484
  %v565 = vmul.f32 %v485, %v485
  %v566 = vmul.f32 %v486, %v486
  %v567 = vmul.f32 %v487, %v487
  %v568 = vmul.f32 %v488, %v488
  %v569 = vmul.f32 %v489, %v489
  %v570 = vmul.f32 %v490, %v490
  %v571 = vmul.f32 %v491, %v491
  %v572 = vmul.f32 %v492, %v492
  %v573 = vmul.f32 %v493, %v493
  %v574 = vmul.f32 %v494, %v494
  %v575 = vmul.f32 %v495, %v495
  %v576 = vmul.f32 %v496, %v496
  %v577 = vmul.f32 %v497, %v497
  %v578 = vsel %vm97, %v498, 0.0
  %579 = vadd.xlane.f32.xlu0 %v578
  %v580 = vpop.xlane.xlu0 %579
  %v581 = vsel %vm97, %v499, 0.0
  %582 = vadd.xlane.f32.xlu0 %v581
  %v583 = vpop.xlane.xlu0 %582
  %v584 = vsel %vm97, %v500, 0.0
  %585 = vadd.xlane.f32.xlu0 %v584
  %v586 = vpop.xlane.xlu0 %585
  %v587 = vsel %vm97, %v501, 0.0
  %588 = vadd.xlane.f32.xlu0 %v587
  %v589 = vpop.xlane.xlu0 %588
  %v590 = vsel %vm97, %v502, 0.0
  %591 = vadd.xlane.f32.xlu0 %v590
  %v592 = vpop.xlane.xlu0 %591
  %v593 = vsel %vm97, %v503, 0.0
  %594 = vadd.xlane.f32.xlu0 %v593
  %v595 = vpop.xlane.xlu0 %594
  %v596 = vsel %vm97, %v504, 0.0
  %597 = vadd.xlane.f32.xlu0 %v596
  %v598 = vpop.xlane.xlu0 %597
  %v599 = vsel %vm97, %v505, 0.0
  %600 = vadd.xlane.f32.xlu0 %v599
  %v601 = vpop.xlane.xlu0 %600
  %v602 = vsel %vm97, %v506, 0.0
  %603 = vadd.xlane.f32.xlu0 %v602
  %v604 = vpop.xlane.xlu0 %603
  %v605 = vsel %vm97, %v507, 0.0
  %606 = vadd.xlane.f32.xlu0 %v605
  %v607 = vpop.xlane.xlu0 %606
  %v608 = vsel %vm97, %v508, 0.0
  %609 = vadd.xlane.f32.xlu0 %v608
  %v610 = vpop.xlane.xlu0 %609
  %v611 = vsel %vm97, %v509, 0.0
  %612 = vadd.xlane.f32.xlu0 %v611
  %v613 = vpop.xlane.xlu0 %612
  %v614 = vsel %vm97, %v510, 0.0
  %615 = vadd.xlane.f32.xlu0 %v614
  %v616 = vpop.xlane.xlu0 %615
  %v617 = vsel %vm97, %v511, 0.0
  %618 = vadd.xlane.f32.xlu0 %v617
  %v619 = vpop.xlane.xlu0 %618
  %v620 = vsel %vm97, %v512, 0.0
  %621 = vadd.xlane.f32.xlu0 %v620
  %v622 = vpop.xlane.xlu0 %621
  %v623 = vsel %vm97, %v513, 0.0
  %624 = vadd.xlane.f32.xlu0 %v623
  %v625 = vpop.xlane.xlu0 %624
  %v626 = vsel %vm97, %v514, 0.0
  %627 = vadd.xlane.f32.xlu0 %v626
  %v628 = vpop.xlane.xlu0 %627
  %v629 = vsel %vm97, %v515, 0.0
  %630 = vadd.xlane.f32.xlu0 %v629
  %v631 = vpop.xlane.xlu0 %630
  %v632 = vsel %vm97, %v516, 0.0
  %633 = vadd.xlane.f32.xlu0 %v632
  %v634 = vpop.xlane.xlu0 %633
  %v635 = vsel %vm97, %v517, 0.0
  %636 = vadd.xlane.f32.xlu0 %v635
  %v637 = vpop.xlane.xlu0 %636
  %v638 = vsel %vm97, %v518, 0.0
  %639 = vadd.xlane.f32.xlu0 %v638
  %v640 = vpop.xlane.xlu0 %639
  %v641 = vsel %vm97, %v519, 0.0
  %642 = vadd.xlane.f32.xlu0 %v641
  %v643 = vpop.xlane.xlu0 %642
  %v644 = vsel %vm97, %v520, 0.0
  %645 = vadd.xlane.f32.xlu0 %v644
  %v646 = vpop.xlane.xlu0 %645
  %v647 = vsel %vm97, %v521, 0.0
  %648 = vadd.xlane.f32.xlu0 %v647
  %v649 = vpop.xlane.xlu0 %648
  %v650 = vsel %vm97, %v522, 0.0
  %651 = vadd.xlane.f32.xlu0 %v650
  %v652 = vpop.xlane.xlu0 %651
  %v653 = vsel %vm97, %v523, 0.0
  %654 = vadd.xlane.f32.xlu0 %v653
  %v655 = vpop.xlane.xlu0 %654
  %v656 = vsel %vm97, %v524, 0.0
  %657 = vadd.xlane.f32.xlu0 %v656
  %v658 = vpop.xlane.xlu0 %657
  %v659 = vsel %vm97, %v525, 0.0
  %660 = vadd.xlane.f32.xlu0 %v659
  %v661 = vpop.xlane.xlu0 %660
  %v662 = vsel %vm97, %v526, 0.0
  %663 = vadd.xlane.f32.xlu0 %v662
  %v664 = vpop.xlane.xlu0 %663
  %v665 = vsel %vm97, %v527, 0.0
  %666 = vadd.xlane.f32.xlu0 %v665
  %v667 = vpop.xlane.xlu0 %666
  %v668 = vsel %vm97, %v528, 0.0
  %669 = vadd.xlane.f32.xlu0 %v668
  %v670 = vpop.xlane.xlu0 %669
  %v671 = vsel %vm97, %v529, 0.0
  %672 = vadd.xlane.f32.xlu0 %v671
  %v673 = vpop.xlane.xlu0 %672
  %v674 = vsel %vm97, %v530, 0.0
  %675 = vadd.xlane.f32.xlu0 %v674
  %v676 = vpop.xlane.xlu0 %675
  %v677 = vsel %vm97, %v531, 0.0
  %678 = vadd.xlane.f32.xlu0 %v677
  %v679 = vpop.xlane.xlu0 %678
  %v680 = vsel %vm97, %v532, 0.0
  %681 = vadd.xlane.f32.xlu0 %v680
  %v682 = vpop.xlane.xlu0 %681
  %v683 = vsel %vm97, %v533, 0.0
  %684 = vadd.xlane.f32.xlu0 %v683
  %v685 = vpop.xlane.xlu0 %684
  %v686 = vsel %vm97, %v534, 0.0
  %687 = vadd.xlane.f32.xlu0 %v686
  %v688 = vpop.xlane.xlu0 %687
  %v689 = vsel %vm97, %v535, 0.0
  %690 = vadd.xlane.f32.xlu0 %v689
  %v691 = vpop.xlane.xlu0 %690
  %v692 = vsel %vm97, %v536, 0.0
  %693 = vadd.xlane.f32.xlu0 %v692
  %v694 = vpop.xlane.xlu0 %693
  %v695 = vsel %vm97, %v537, 0.0
  %696 = vadd.xlane.f32.xlu0 %v695
  %v697 = vpop.xlane.xlu0 %696
  %v698 = vsel %vm97, %v538, 0.0
  %699 = vadd.xlane.f32.xlu0 %v698
  %v700 = vpop.xlane.xlu0 %699
  %v701 = vsel %vm97, %v539, 0.0
  %702 = vadd.xlane.f32.xlu0 %v701
  %v703 = vpop.xlane.xlu0 %702
  %v704 = vsel %vm97, %v540, 0.0
  %705 = vadd.xlane.f32.xlu0 %v704
  %v706 = vpop.xlane.xlu0 %705
  %v707 = vsel %vm97, %v541, 0.0
  %708 = vadd.xlane.f32.xlu0 %v707
  %v709 = vpop.xlane.xlu0 %708
  %v710 = vsel %vm97, %v542, 0.0
  %711 = vadd.xlane.f32.xlu0 %v710
  %v712 = vpop.xlane.xlu0 %711
  %v713 = vsel %vm97, %v543, 0.0
  %714 = vadd.xlane.f32.xlu0 %v713
  %v715 = vpop.xlane.xlu0 %714
  %v716 = vsel %vm97, %v544, 0.0
  %717 = vadd.xlane.f32.xlu0 %v716
  %v718 = vpop.xlane.xlu0 %717
  %v719 = vsel %vm97, %v545, 0.0
  %720 = vadd.xlane.f32.xlu0 %v719
  %v721 = vpop.xlane.xlu0 %720
  %v722 = vsel %vm97, %v546, 0.0
  %723 = vadd.xlane.f32.xlu0 %v722
  %v724 = vpop.xlane.xlu0 %723
  %v725 = vsel %vm97, %v547, 0.0
  %726 = vadd.xlane.f32.xlu0 %v725
  %v727 = vpop.xlane.xlu0 %726
  %v728 = vsel %vm97, %v548, 0.0
  %729 = vadd.xlane.f32.xlu0 %v728
  %v730 = vpop.xlane.xlu0 %729
  %v731 = vsel %vm97, %v549, 0.0
  %732 = vadd.xlane.f32.xlu0 %v731
  %v733 = vpop.xlane.xlu0 %732
  %v734 = vsel %vm97, %v550, 0.0
  %735 = vadd.xlane.f32.xlu0 %v734
  %v736 = vpop.xlane.xlu0 %735
  %v737 = vsel %vm97, %v551, 0.0
  %738 = vadd.xlane.f32.xlu0 %v737
  %v739 = vpop.xlane.xlu0 %738
  %v740 = vsel %vm97, %v552, 0.0
  %741 = vadd.xlane.f32.xlu0 %v740
  %v742 = vpop.xlane.xlu0 %741
  %v743 = vsel %vm97, %v553, 0.0
  %744 = vadd.xlane.f32.xlu0 %v743
  %v745 = vpop.xlane.xlu0 %744
  %v746 = vsel %vm97, %v554, 0.0
  %747 = vadd.xlane.f32.xlu0 %v746
  %v748 = vpop.xlane.xlu0 %747
  %v749 = vsel %vm97, %v555, 0.0
  %750 = vadd.xlane.f32.xlu0 %v749
  %v751 = vpop.xlane.xlu0 %750
  %v752 = vsel %vm97, %v556, 0.0
  %753 = vadd.xlane.f32.xlu0 %v752
  %v754 = vpop.xlane.xlu0 %753
  %v755 = vsel %vm97, %v557, 0.0
  %756 = vadd.xlane.f32.xlu0 %v755
  %v757 = vpop.xlane.xlu0 %756
  %v758 = vsel %vm97, %v558, 0.0
  %759 = vadd.xlane.f32.xlu0 %v758
  %v760 = vpop.xlane.xlu0 %759
  %v761 = vsel %vm97, %v559, 0.0
  %762 = vadd.xlane.f32.xlu0 %v761
  %v763 = vpop.xlane.xlu0 %762
  %v764 = vsel %vm97, %v560, 0.0
  %765 = vadd.xlane.f32.xlu0 %v764
  %v766 = vpop.xlane.xlu0 %765
  %v767 = vsel %vm97, %v561, 0.0
  %768 = vadd.xlane.f32.xlu0 %v767
  %v769 = vpop.xlane.xlu0 %768
  %v770 = vsel %vm97, %v562, 0.0
  %771 = vadd.xlane.f32.xlu0 %v770
  %v772 = vpop.xlane.xlu0 %771
  %v773 = vsel %vm97, %v563, 0.0
  %774 = vadd.xlane.f32.xlu0 %v773
  %v775 = vpop.xlane.xlu0 %774
  %v776 = vsel %vm97, %v564, 0.0
  %777 = vadd.xlane.f32.xlu0 %v776
  %v778 = vpop.xlane.xlu0 %777
  %v779 = vsel %vm97, %v565, 0.0
  %780 = vadd.xlane.f32.xlu0 %v779
  %v781 = vpop.xlane.xlu0 %780
  %v782 = vsel %vm97, %v566, 0.0
  %783 = vadd.xlane.f32.xlu0 %v782
  %v784 = vpop.xlane.xlu0 %783
  %v785 = vsel %vm97, %v567, 0.0
  %786 = vadd.xlane.f32.xlu0 %v785
  %v787 = vpop.xlane.xlu0 %786
  %v788 = vsel %vm97, %v568, 0.0
  %789 = vadd.xlane.f32.xlu0 %v788
  %v790 = vpop.xlane.xlu0 %789
  %v791 = vsel %vm97, %v569, 0.0
  %792 = vadd.xlane.f32.xlu0 %v791
  %v793 = vpop.xlane.xlu0 %792
  %v794 = vsel %vm97, %v570, 0.0
  %795 = vadd.xlane.f32.xlu0 %v794
  %v796 = vpop.xlane.xlu0 %795
  %v797 = vsel %vm97, %v571, 0.0
  %798 = vadd.xlane.f32.xlu0 %v797
  %v799 = vpop.xlane.xlu0 %798
  %v800 = vsel %vm97, %v572, 0.0
  %801 = vadd.xlane.f32.xlu0 %v800
  %v802 = vpop.xlane.xlu0 %801
  %v803 = vsel %vm97, %v573, 0.0
  %804 = vadd.xlane.f32.xlu0 %v803
  %v805 = vpop.xlane.xlu0 %804
  %v806 = vsel %vm97, %v574, 0.0
  %807 = vadd.xlane.f32.xlu0 %v806
  %v808 = vpop.xlane.xlu0 %807
  %v809 = vsel %vm97, %v575, 0.0
  %810 = vadd.xlane.f32.xlu0 %v809
  %v811 = vpop.xlane.xlu0 %810
  %v812 = vsel %vm97, %v576, 0.0
  %813 = vadd.xlane.f32.xlu0 %v812
  %v814 = vpop.xlane.xlu0 %813
  %v815 = vsel %vm97, %v577, 0.0
  %816 = vadd.xlane.f32.xlu0 %v815
  %v817 = vpop.xlane.xlu0 %816
  %v818 = vmul.f32 %v580, 0.020408163
  %v819 = vmul.f32 %v583, 0.020408163
  %v820 = vmul.f32 %v586, 0.020408163
  %v821 = vmul.f32 %v589, 0.020408163
  %v822 = vmul.f32 %v592, 0.020408163
  %v823 = vmul.f32 %v595, 0.020408163
  %v824 = vmul.f32 %v598, 0.020408163
  %v825 = vmul.f32 %v601, 0.020408163
  %v826 = vmul.f32 %v604, 0.020408163
  %v827 = vmul.f32 %v607, 0.020408163
  %v828 = vmul.f32 %v610, 0.020408163
  %v829 = vmul.f32 %v613, 0.020408163
  %v830 = vmul.f32 %v616, 0.020408163
  %v831 = vmul.f32 %v619, 0.020408163
  %v832 = vmul.f32 %v622, 0.020408163
  %v833 = vmul.f32 %v625, 0.020408163
  %v834 = vmul.f32 %v628, 0.020408163
  %v835 = vmul.f32 %v631, 0.020408163
  %v836 = vmul.f32 %v634, 0.020408163
  %v837 = vmul.f32 %v637, 0.020408163
  %v838 = vmul.f32 %v640, 0.020408163
  %v839 = vmul.f32 %v643, 0.020408163
  %v840 = vmul.f32 %v646, 0.020408163
  %v841 = vmul.f32 %v649, 0.020408163
  %v842 = vmul.f32 %v652, 0.020408163
  %v843 = vmul.f32 %v655, 0.020408163
  %v844 = vmul.f32 %v658, 0.020408163
  %v845 = vmul.f32 %v661, 0.020408163
  %v846 = vmul.f32 %v664, 0.020408163
  %v847 = vmul.f32 %v667, 0.020408163
  %v848 = vmul.f32 %v670, 0.020408163
  %v849 = vmul.f32 %v673, 0.020408163
  %v850 = vmul.f32 %v676, 0.020408163
  %v851 = vmul.f32 %v679, 0.020408163
  %v852 = vmul.f32 %v682, 0.020408163
  %v853 = vmul.f32 %v685, 0.020408163
  %v854 = vmul.f32 %v688, 0.020408163
  %v855 = vmul.f32 %v691, 0.020408163
  %v856 = vmul.f32 %v694, 0.020408163
  %v857 = vmul.f32 %v697, 0.020408163
  %v858 = vmul.f32 %v700, 0.020408163
  %v859 = vmul.f32 %v703, 0.020408163
  %v860 = vmul.f32 %v706, 0.020408163
  %v861 = vmul.f32 %v709, 0.020408163
  %v862 = vmul.f32 %v712, 0.020408163
  %v863 = vmul.f32 %v715, 0.020408163
  %v864 = vmul.f32 %v718, 0.020408163
  %v865 = vmul.f32 %v721, 0.020408163
  %v866 = vmul.f32 %v724, 0.020408163
  %v867 = vmul.f32 %v727, 0.020408163
  %v868 = vmul.f32 %v730, 0.020408163
  %v869 = vmul.f32 %v733, 0.020408163
  %v870 = vmul.f32 %v736, 0.020408163
  %v871 = vmul.f32 %v739, 0.020408163
  %v872 = vmul.f32 %v742, 0.020408163
  %v873 = vmul.f32 %v745, 0.020408163
  %v874 = vmul.f32 %v748, 0.020408163
  %v875 = vmul.f32 %v751, 0.020408163
  %v876 = vmul.f32 %v754, 0.020408163
  %v877 = vmul.f32 %v757, 0.020408163
  %v878 = vmul.f32 %v760, 0.020408163
  %v879 = vmul.f32 %v763, 0.020408163
  %v880 = vmul.f32 %v766, 0.020408163
  %v881 = vmul.f32 %v769, 0.020408163
  %v882 = vmul.f32 %v772, 0.020408163
  %v883 = vmul.f32 %v775, 0.020408163
  %v884 = vmul.f32 %v778, 0.020408163
  %v885 = vmul.f32 %v781, 0.020408163
  %v886 = vmul.f32 %v784, 0.020408163
  %v887 = vmul.f32 %v787, 0.020408163
  %v888 = vmul.f32 %v790, 0.020408163
  %v889 = vmul.f32 %v793, 0.020408163
  %v890 = vmul.f32 %v796, 0.020408163
  %v891 = vmul.f32 %v799, 0.020408163
  %v892 = vmul.f32 %v802, 0.020408163
  %v893 = vmul.f32 %v805, 0.020408163
  %v894 = vmul.f32 %v808, 0.020408163
  %v895 = vmul.f32 %v811, 0.020408163
  %v896 = vmul.f32 %v814, 0.020408163
  %v897 = vmul.f32 %v817, 0.020408163
  %v898 = vld [vmem:[%s1] sm:$0xff]
  %v899 = vld [vmem:[%s1 + $0x8] sm:$0xff]
  %v900 = vld [vmem:[%s1 + $0x10] sm:$0xff]
  %v901 = vld [vmem:[%s1 + $0x18] sm:$0xff]
  %v902 = vld [vmem:[%s1 + $0x20] sm:$0xff]
  %v903 = vld [vmem:[%s1 + $0x28] sm:$0xff]
  %v904 = vld [vmem:[%s1 + $0x30] sm:$0xff]
  %v905 = vld [vmem:[%s1 + $0x38] sm:$0xff]
  %v906 = vld [vmem:[%s1 + $0x40] sm:$0xff]
  %v907 = vld [vmem:[%s1 + $0x48] sm:$0xff]
  %v908 = vld [vmem:[%s1 + $0x50] sm:$0xff]
  %v909 = vld [vmem:[%s1 + $0x58] sm:$0xff]
  %v910 = vld [vmem:[%s1 + $0x60] sm:$0xff]
  %v911 = vld [vmem:[%s1 + $0x68] sm:$0xff]
  %v912 = vld [vmem:[%s1 + $0x70] sm:$0xff]
  %v913 = vld [vmem:[%s1 + $0x78] sm:$0xff]
  %v914 = vld [vmem:[%s1 + $0x80] sm:$0xff]
  %v915 = vld [vmem:[%s1 + $0x88] sm:$0xff]
  %v916 = vld [vmem:[%s1 + $0x90] sm:$0xff]
  %v917 = vld [vmem:[%s1 + $0x98] sm:$0xff]
  %v918 = vld [vmem:[%s1 + $0xa0] sm:$0xff]
  %v919 = vld [vmem:[%s1 + $0xa8] sm:$0xff]
  %v920 = vld [vmem:[%s1 + $0xb0] sm:$0xff]
  %v921 = vld [vmem:[%s1 + $0xb8] sm:$0xff]
  %v922 = vld [vmem:[%s1 + $0xc0] sm:$0xff]
  %v923 = vld [vmem:[%s1 + $0xc8] sm:$0xff]
  %v924 = vld [vmem:[%s1 + $0xd0] sm:$0xff]
  %v925 = vld [vmem:[%s1 + $0xd8] sm:$0xff]
  %v926 = vld [vmem:[%s1 + $0xe0] sm:$0xff]
  %v927 = vld [vmem:[%s1 + $0xe8] sm:$0xff]
  %v928 = vld [vmem:[%s1 + $0xf0] sm:$0xff]
  %v929 = vld [vmem:[%s1 + $0xf8] sm:$0xff]
  %v930 = vld [vmem:[%s1 + $0x100] sm:$0xff]
  %v931 = vld [vmem:[%s1 + $0x108] sm:$0xff]
  %v932 = vld [vmem:[%s1 + $0x110] sm:$0xff]
  %v933 = vld [vmem:[%s1 + $0x118] sm:$0xff]
  %v934 = vld [vmem:[%s1 + $0x120] sm:$0xff]
  %v935 = vld [vmem:[%s1 + $0x128] sm:$0xff]
  %v936 = vld [vmem:[%s1 + $0x130] sm:$0xff]
  %v937 = vld [vmem:[%s1 + $0x138] sm:$0xff]
  %v938 = vld [vmem:[%s1 + $0x140] sm:$0xff]
  %v939 = vld [vmem:[%s1 + $0x148] sm:$0xff]
  %v940 = vld [vmem:[%s1 + $0x150] sm:$0xff]
  %v941 = vld [vmem:[%s1 + $0x158] sm:$0xff]
  %v942 = vld [vmem:[%s1 + $0x160] sm:$0xff]
  %v943 = vld [vmem:[%s1 + $0x168] sm:$0xff]
  %v944 = vld [vmem:[%s1 + $0x170] sm:$0xff]
  %v945 = vld [vmem:[%s1 + $0x178] sm:$0xff]
  %v946 = vld [vmem:[%s1 + $0x180] sm:$0xff]
  %v947 = vld [vmem:[%s1 + $0x188] sm:$0xff]
  %v948 = vld [vmem:[%s1 + $0x190] sm:$0xff]
  %v949 = vld [vmem:[%s1 + $0x198] sm:$0xff]
  %v950 = vld [vmem:[%s1 + $0x1a0] sm:$0xff]
  %v951 = vld [vmem:[%s1 + $0x1a8] sm:$0xff]
  %v952 = vld [vmem:[%s1 + $0x1b0] sm:$0xff]
  %v953 = vld [vmem:[%s1 + $0x1b8] sm:$0xff]
  %v954 = vld [vmem:[%s1 + $0x1c0] sm:$0xff]
  %v955 = vld [vmem:[%s1 + $0x1c8] sm:$0xff]
  %v956 = vld [vmem:[%s1 + $0x1d0] sm:$0xff]
  %v957 = vld [vmem:[%s1 + $0x1d8] sm:$0xff]
  %v958 = vld [vmem:[%s1 + $0x1e0] sm:$0xff]
  %v959 = vld [vmem:[%s1 + $0x1e8] sm:$0xff]
  %v960 = vld [vmem:[%s1 + $0x1f0] sm:$0xff]
  %v961 = vld [vmem:[%s1 + $0x1f8] sm:$0xff]
  %v962 = vld [vmem:[%s1 + $0x200] sm:$0xff]
  %v963 = vld [vmem:[%s1 + $0x208] sm:$0xff]
  %v964 = vld [vmem:[%s1 + $0x210] sm:$0xff]
  %v965 = vld [vmem:[%s1 + $0x218] sm:$0xff]
  %v966 = vld [vmem:[%s1 + $0x220] sm:$0xff]
  %v967 = vld [vmem:[%s1 + $0x228] sm:$0xff]
  %v968 = vld [vmem:[%s1 + $0x230] sm:$0xff]
  %v969 = vld [vmem:[%s1 + $0x238] sm:$0xff]
  %v970 = vld [vmem:[%s1 + $0x240] sm:$0xff]
  %v971 = vld [vmem:[%s1 + $0x248] sm:$0xff]
  %v972 = vld [vmem:[%s1 + $0x250] sm:$0xff]
  %v973 = vld [vmem:[%s1 + $0x258] sm:$0xff]
  %v974 = vld [vmem:[%s1 + $0x260] sm:$0xff]
  %v975 = vld [vmem:[%s1 + $0x268] sm:$0xff]
  %v976 = vld [vmem:[%s1 + $0x270] sm:$0xff]
  %v977 = vld [vmem:[%s1 + $0x278] sm:$0xff]
  %v978 = vadd.f32 %v818, 1e-05
  %v979 = vadd.f32 %v819, 1e-05
  %v980 = vadd.f32 %v820, 1e-05
  %v981 = vadd.f32 %v821, 1e-05
  %v982 = vadd.f32 %v822, 1e-05
  %v983 = vadd.f32 %v823, 1e-05
  %v984 = vadd.f32 %v824, 1e-05
  %v985 = vadd.f32 %v825, 1e-05
  %v986 = vadd.f32 %v826, 1e-05
  %v987 = vadd.f32 %v827, 1e-05
  %v988 = vadd.f32 %v828, 1e-05
  %v989 = vadd.f32 %v829, 1e-05
  %v990 = vadd.f32 %v830, 1e-05
  %v991 = vadd.f32 %v831, 1e-05
  %v992 = vadd.f32 %v832, 1e-05
  %v993 = vadd.f32 %v833, 1e-05
  %v994 = vadd.f32 %v834, 1e-05
  %v995 = vadd.f32 %v835, 1e-05
  %v996 = vadd.f32 %v836, 1e-05
  %v997 = vadd.f32 %v837, 1e-05
  %v998 = vadd.f32 %v838, 1e-05
  %v999 = vadd.f32 %v839, 1e-05
  %v1000 = vadd.f32 %v840, 1e-05
  %v1001 = vadd.f32 %v841, 1e-05
  %v1002 = vadd.f32 %v842, 1e-05
  %v1003 = vadd.f32 %v843, 1e-05
  %v1004 = vadd.f32 %v844, 1e-05
  %v1005 = vadd.f32 %v845, 1e-05
  %v1006 = vadd.f32 %v846, 1e-05
  %v1007 = vadd.f32 %v847, 1e-05
  %v1008 = vadd.f32 %v848, 1e-05
  %v1009 = vadd.f32 %v849, 1e-05
  %v1010 = vadd.f32 %v850, 1e-05
  %v1011 = vadd.f32 %v851, 1e-05
  %v1012 = vadd.f32 %v852, 1e-05
  %v1013 = vadd.f32 %v853, 1e-05
  %v1014 = vadd.f32 %v854, 1e-05
  %v1015 = vadd.f32 %v855, 1e-05
  %v1016 = vadd.f32 %v856, 1e-05
  %v1017 = vadd.f32 %v857, 1e-05
  %v1018 = vadd.f32 %v858, 1e-05
  %v1019 = vadd.f32 %v859, 1e-05
  %v1020 = vadd.f32 %v860, 1e-05
  %v1021 = vadd.f32 %v861, 1e-05
  %v1022 = vadd.f32 %v862, 1e-05
  %v1023 = vadd.f32 %v863, 1e-05
  %v1024 = vadd.f32 %v864, 1e-05
  %v1025 = vadd.f32 %v865, 1e-05
  %v1026 = vadd.f32 %v866, 1e-05
  %v1027 = vadd.f32 %v867, 1e-05
  %v1028 = vadd.f32 %v868, 1e-05
  %v1029 = vadd.f32 %v869, 1e-05
  %v1030 = vadd.f32 %v870, 1e-05
  %v1031 = vadd.f32 %v871, 1e-05
  %v1032 = vadd.f32 %v872, 1e-05
  %v1033 = vadd.f32 %v873, 1e-05
  %v1034 = vadd.f32 %v874, 1e-05
  %v1035 = vadd.f32 %v875, 1e-05
  %v1036 = vadd.f32 %v876, 1e-05
  %v1037 = vadd.f32 %v877, 1e-05
  %v1038 = vadd.f32 %v878, 1e-05
  %v1039 = vadd.f32 %v879, 1e-05
  %v1040 = vadd.f32 %v880, 1e-05
  %v1041 = vadd.f32 %v881, 1e-05
  %v1042 = vadd.f32 %v882, 1e-05
  %v1043 = vadd.f32 %v883, 1e-05
  %v1044 = vadd.f32 %v884, 1e-05
  %v1045 = vadd.f32 %v885, 1e-05
  %v1046 = vadd.f32 %v886, 1e-05
  %v1047 = vadd.f32 %v887, 1e-05
  %v1048 = vadd.f32 %v888, 1e-05
  %v1049 = vadd.f32 %v889, 1e-05
  %v1050 = vadd.f32 %v890, 1e-05
  %v1051 = vadd.f32 %v891, 1e-05
  %v1052 = vadd.f32 %v892, 1e-05
  %v1053 = vadd.f32 %v893, 1e-05
  %v1054 = vadd.f32 %v894, 1e-05
  %v1055 = vadd.f32 %v895, 1e-05
  %v1056 = vadd.f32 %v896, 1e-05
  %v1057 = vadd.f32 %v897, 1e-05
  %v1058 = vrsqrt.pop %v978
  %v1059 = vrsqrt.pop %v979
  %v1060 = vrsqrt.pop %v980
  %v1061 = vrsqrt.pop %v981
  %v1062 = vrsqrt.pop %v982
  %v1063 = vrsqrt.pop %v983
  %v1064 = vrsqrt.pop %v984
  %v1065 = vrsqrt.pop %v985
  %v1066 = vrsqrt.pop %v986
  %v1067 = vrsqrt.pop %v987
  %v1068 = vrsqrt.pop %v988
  %v1069 = vrsqrt.pop %v989
  %v1070 = vrsqrt.pop %v990
  %v1071 = vrsqrt.pop %v991
  %v1072 = vrsqrt.pop %v992
  %v1073 = vrsqrt.pop %v993
  %v1074 = vrsqrt.pop %v994
  %v1075 = vrsqrt.pop %v995
  %v1076 = vrsqrt.pop %v996
  %v1077 = vrsqrt.pop %v997
  %v1078 = vrsqrt.pop %v998
  %v1079 = vrsqrt.pop %v999
  %v1080 = vrsqrt.pop %v1000
  %v1081 = vrsqrt.pop %v1001
  %v1082 = vrsqrt.pop %v1002
  %v1083 = vrsqrt.pop %v1003
  %v1084 = vrsqrt.pop %v1004
  %v1085 = vrsqrt.pop %v1005
  %v1086 = vrsqrt.pop %v1006
  %v1087 = vrsqrt.pop %v1007
  %v1088 = vrsqrt.pop %v1008
  %v1089 = vrsqrt.pop %v1009
  %v1090 = vrsqrt.pop %v1010
  %v1091 = vrsqrt.pop %v1011
  %v1092 = vrsqrt.pop %v1012
  %v1093 = vrsqrt.pop %v1013
  %v1094 = vrsqrt.pop %v1014
  %v1095 = vrsqrt.pop %v1015
  %v1096 = vrsqrt.pop %v1016
  %v1097 = vrsqrt.pop %v1017
  %v1098 = vrsqrt.pop %v1018
  %v1099 = vrsqrt.pop %v1019
  %v1100 = vrsqrt.pop %v1020
  %v1101 = vrsqrt.pop %v1021
  %v1102 = vrsqrt.pop %v1022
  %v1103 = vrsqrt.pop %v1023
  %v1104 = vrsqrt.pop %v1024
  %v1105 = vrsqrt.pop %v1025
  %v1106 = vrsqrt.pop %v1026
  %v1107 = vrsqrt.pop %v1027
  %v1108 = vrsqrt.pop %v1028
  %v1109 = vrsqrt.pop %v1029
  %v1110 = vrsqrt.pop %v1030
  %v1111 = vrsqrt.pop %v1031
  %v1112 = vrsqrt.pop %v1032
  %v1113 = vrsqrt.pop %v1033
  %v1114 = vrsqrt.pop %v1034
  %v1115 = vrsqrt.pop %v1035
  %v1116 = vrsqrt.pop %v1036
  %v1117 = vrsqrt.pop %v1037
  %v1118 = vrsqrt.pop %v1038
  %v1119 = vrsqrt.pop %v1039
  %v1120 = vrsqrt.pop %v1040
  %v1121 = vrsqrt.pop %v1041
  %v1122 = vrsqrt.pop %v1042
  %v1123 = vrsqrt.pop %v1043
  %v1124 = vrsqrt.pop %v1044
  %v1125 = vrsqrt.pop %v1045
  %v1126 = vrsqrt.pop %v1046
  %v1127 = vrsqrt.pop %v1047
  %v1128 = vrsqrt.pop %v1048
  %v1129 = vrsqrt.pop %v1049
  %v1130 = vrsqrt.pop %v1050
  %v1131 = vrsqrt.pop %v1051
  %v1132 = vrsqrt.pop %v1052
  %v1133 = vrsqrt.pop %v1053
  %v1134 = vrsqrt.pop %v1054
  %v1135 = vrsqrt.pop %v1055
  %v1136 = vrsqrt.pop %v1056
  %v1137 = vrsqrt.pop %v1057
  %v1138 = vmul.f32 %v898, %v1058
  %v1139 = vmul.f32 %v899, %v1059
  %v1140 = vmul.f32 %v900, %v1060
  %v1141 = vmul.f32 %v901, %v1061
  %v1142 = vmul.f32 %v902, %v1062
  %v1143 = vmul.f32 %v903, %v1063
  %v1144 = vmul.f32 %v904, %v1064
  %v1145 = vmul.f32 %v905, %v1065
  %v1146 = vmul.f32 %v906, %v1066
  %v1147 = vmul.f32 %v907, %v1067
  %v1148 = vmul.f32 %v908, %v1068
  %v1149 = vmul.f32 %v909, %v1069
  %v1150 = vmul.f32 %v910, %v1070
  %v1151 = vmul.f32 %v911, %v1071
  %v1152 = vmul.f32 %v912, %v1072
  %v1153 = vmul.f32 %v913, %v1073
  %v1154 = vmul.f32 %v914, %v1074
  %v1155 = vmul.f32 %v915, %v1075
  %v1156 = vmul.f32 %v916, %v1076
  %v1157 = vmul.f32 %v917, %v1077
  %v1158 = vmul.f32 %v918, %v1078
  %v1159 = vmul.f32 %v919, %v1079
  %v1160 = vmul.f32 %v920, %v1080
  %v1161 = vmul.f32 %v921, %v1081
  %v1162 = vmul.f32 %v922, %v1082
  %v1163 = vmul.f32 %v923, %v1083
  %v1164 = vmul.f32 %v924, %v1084
  %v1165 = vmul.f32 %v925, %v1085
  %v1166 = vmul.f32 %v926, %v1086
  %v1167 = vmul.f32 %v927, %v1087
  %v1168 = vmul.f32 %v928, %v1088
  %v1169 = vmul.f32 %v929, %v1089
  %v1170 = vmul.f32 %v930, %v1090
  %v1171 = vmul.f32 %v931, %v1091
  %v1172 = vmul.f32 %v932, %v1092
  %v1173 = vmul.f32 %v933, %v1093
  %v1174 = vmul.f32 %v934, %v1094
  %v1175 = vmul.f32 %v935, %v1095
  %v1176 = vmul.f32 %v936, %v1096
  %v1177 = vmul.f32 %v937, %v1097
  %v1178 = vmul.f32 %v938, %v1098
  %v1179 = vmul.f32 %v939, %v1099
  %v1180 = vmul.f32 %v940, %v1100
  %v1181 = vmul.f32 %v941, %v1101
  %v1182 = vmul.f32 %v942, %v1102
  %v1183 = vmul.f32 %v943, %v1103
  %v1184 = vmul.f32 %v944, %v1104
  %v1185 = vmul.f32 %v945, %v1105
  %v1186 = vmul.f32 %v946, %v1106
  %v1187 = vmul.f32 %v947, %v1107
  %v1188 = vmul.f32 %v948, %v1108
  %v1189 = vmul.f32 %v949, %v1109
  %v1190 = vmul.f32 %v950, %v1110
  %v1191 = vmul.f32 %v951, %v1111
  %v1192 = vmul.f32 %v952, %v1112
  %v1193 = vmul.f32 %v953, %v1113
  %v1194 = vmul.f32 %v954, %v1114
  %v1195 = vmul.f32 %v955, %v1115
  %v1196 = vmul.f32 %v956, %v1116
  %v1197 = vmul.f32 %v957, %v1117
  %v1198 = vmul.f32 %v958, %v1118
  %v1199 = vmul.f32 %v959, %v1119
  %v1200 = vmul.f32 %v960, %v1120
  %v1201 = vmul.f32 %v961, %v1121
  %v1202 = vmul.f32 %v962, %v1122
  %v1203 = vmul.f32 %v963, %v1123
  %v1204 = vmul.f32 %v964, %v1124
  %v1205 = vmul.f32 %v965, %v1125
  %v1206 = vmul.f32 %v966, %v1126
  %v1207 = vmul.f32 %v967, %v1127
  %v1208 = vmul.f32 %v968, %v1128
  %v1209 = vmul.f32 %v969, %v1129
  %v1210 = vmul.f32 %v970, %v1130
  %v1211 = vmul.f32 %v971, %v1131
  %v1212 = vmul.f32 %v972, %v1132
  %v1213 = vmul.f32 %v973, %v1133
  %v1214 = vmul.f32 %v974, %v1134
  %v1215 = vmul.f32 %v975, %v1135
  %v1216 = vmul.f32 %v976, %v1136
  %v1217 = vmul.f32 %v977, %v1137
  %1219 = vset.pattern.permute.xlu0 0
  %1220 = vperm.xlu0 %1219, %v1138
  %v1221 = vpop.permute.xlu0 %1220
  %1224 = vset.pattern.permute.xlu0 0
  %1225 = vperm.xlu0 %1224, %v1139
  %v1226 = vpop.permute.xlu0 %1225
  %1229 = vset.pattern.permute.xlu0 0
  %1230 = vperm.xlu0 %1229, %v1140
  %v1231 = vpop.permute.xlu0 %1230
  %1234 = vset.pattern.permute.xlu0 0
  %1235 = vperm.xlu0 %1234, %v1141
  %v1236 = vpop.permute.xlu0 %1235
  %1239 = vset.pattern.permute.xlu0 0
  %1240 = vperm.xlu0 %1239, %v1142
  %v1241 = vpop.permute.xlu0 %1240
  %1244 = vset.pattern.permute.xlu0 0
  %1245 = vperm.xlu0 %1244, %v1143
  %v1246 = vpop.permute.xlu0 %1245
  %1249 = vset.pattern.permute.xlu0 0
  %1250 = vperm.xlu0 %1249, %v1144
  %v1251 = vpop.permute.xlu0 %1250
  %1254 = vset.pattern.permute.xlu0 0
  %1255 = vperm.xlu0 %1254, %v1145
  %v1256 = vpop.permute.xlu0 %1255
  %1259 = vset.pattern.permute.xlu0 0
  %1260 = vperm.xlu0 %1259, %v1146
  %v1261 = vpop.permute.xlu0 %1260
  %1264 = vset.pattern.permute.xlu0 0
  %1265 = vperm.xlu0 %1264, %v1147
  %v1266 = vpop.permute.xlu0 %1265
  %1269 = vset.pattern.permute.xlu0 0
  %1270 = vperm.xlu0 %1269, %v1148
  %v1271 = vpop.permute.xlu0 %1270
  %1274 = vset.pattern.permute.xlu0 0
  %1275 = vperm.xlu0 %1274, %v1149
  %v1276 = vpop.permute.xlu0 %1275
  %1279 = vset.pattern.permute.xlu0 0
  %1280 = vperm.xlu0 %1279, %v1150
  %v1281 = vpop.permute.xlu0 %1280
  %1284 = vset.pattern.permute.xlu0 0
  %1285 = vperm.xlu0 %1284, %v1151
  %v1286 = vpop.permute.xlu0 %1285
  %1289 = vset.pattern.permute.xlu0 0
  %1290 = vperm.xlu0 %1289, %v1152
  %v1291 = vpop.permute.xlu0 %1290
  %1294 = vset.pattern.permute.xlu0 0
  %1295 = vperm.xlu0 %1294, %v1153
  %v1296 = vpop.permute.xlu0 %1295
  %1299 = vset.pattern.permute.xlu0 0
  %1300 = vperm.xlu0 %1299, %v1154
  %v1301 = vpop.permute.xlu0 %1300
  %1304 = vset.pattern.permute.xlu0 0
  %1305 = vperm.xlu0 %1304, %v1155
  %v1306 = vpop.permute.xlu0 %1305
  %1309 = vset.pattern.permute.xlu0 0
  %1310 = vperm.xlu0 %1309, %v1156
  %v1311 = vpop.permute.xlu0 %1310
  %1314 = vset.pattern.permute.xlu0 0
  %1315 = vperm.xlu0 %1314, %v1157
  %v1316 = vpop.permute.xlu0 %1315
  %1319 = vset.pattern.permute.xlu0 0
  %1320 = vperm.xlu0 %1319, %v1158
  %v1321 = vpop.permute.xlu0 %1320
  %1324 = vset.pattern.permute.xlu0 0
  %1325 = vperm.xlu0 %1324, %v1159
  %v1326 = vpop.permute.xlu0 %1325
  %1329 = vset.pattern.permute.xlu0 0
  %1330 = vperm.xlu0 %1329, %v1160
  %v1331 = vpop.permute.xlu0 %1330
  %1334 = vset.pattern.permute.xlu0 0
  %1335 = vperm.xlu0 %1334, %v1161
  %v1336 = vpop.permute.xlu0 %1335
  %1339 = vset.pattern.permute.xlu0 0
  %1340 = vperm.xlu0 %1339, %v1162
  %v1341 = vpop.permute.xlu0 %1340
  %1344 = vset.pattern.permute.xlu0 0
  %1345 = vperm.xlu0 %1344, %v1163
  %v1346 = vpop.permute.xlu0 %1345
  %1349 = vset.pattern.permute.xlu0 0
  %1350 = vperm.xlu0 %1349, %v1164
  %v1351 = vpop.permute.xlu0 %1350
  %1354 = vset.pattern.permute.xlu0 0
  %1355 = vperm.xlu0 %1354, %v1165
  %v1356 = vpop.permute.xlu0 %1355
  %1359 = vset.pattern.permute.xlu0 0
  %1360 = vperm.xlu0 %1359, %v1166
  %v1361 = vpop.permute.xlu0 %1360
  %1364 = vset.pattern.permute.xlu0 0
  %1365 = vperm.xlu0 %1364, %v1167
  %v1366 = vpop.permute.xlu0 %1365
  %1369 = vset.pattern.permute.xlu0 0
  %1370 = vperm.xlu0 %1369, %v1168
  %v1371 = vpop.permute.xlu0 %1370
  %1374 = vset.pattern.permute.xlu0 0
  %1375 = vperm.xlu0 %1374, %v1169
  %v1376 = vpop.permute.xlu0 %1375
  %1379 = vset.pattern.permute.xlu0 0
  %1380 = vperm.xlu0 %1379, %v1170
  %v1381 = vpop.permute.xlu0 %1380
  %1384 = vset.pattern.permute.xlu0 0
  %1385 = vperm.xlu0 %1384, %v1171
  %v1386 = vpop.permute.xlu0 %1385
  %1389 = vset.pattern.permute.xlu0 0
  %1390 = vperm.xlu0 %1389, %v1172
  %v1391 = vpop.permute.xlu0 %1390
  %1394 = vset.pattern.permute.xlu0 0
  %1395 = vperm.xlu0 %1394, %v1173
  %v1396 = vpop.permute.xlu0 %1395
  %1399 = vset.pattern.permute.xlu0 0
  %1400 = vperm.xlu0 %1399, %v1174
  %v1401 = vpop.permute.xlu0 %1400
  %1404 = vset.pattern.permute.xlu0 0
  %1405 = vperm.xlu0 %1404, %v1175
  %v1406 = vpop.permute.xlu0 %1405
  %1409 = vset.pattern.permute.xlu0 0
  %1410 = vperm.xlu0 %1409, %v1176
  %v1411 = vpop.permute.xlu0 %1410
  %1414 = vset.pattern.permute.xlu0 0
  %1415 = vperm.xlu0 %1414, %v1177
  %v1416 = vpop.permute.xlu0 %1415
  %1419 = vset.pattern.permute.xlu0 0
  %1420 = vperm.xlu0 %1419, %v1178
  %v1421 = vpop.permute.xlu0 %1420
  %1424 = vset.pattern.permute.xlu0 0
  %1425 = vperm.xlu0 %1424, %v1179
  %v1426 = vpop.permute.xlu0 %1425
  %1429 = vset.pattern.permute.xlu0 0
  %1430 = vperm.xlu0 %1429, %v1180
  %v1431 = vpop.permute.xlu0 %1430
  %1434 = vset.pattern.permute.xlu0 0
  %1435 = vperm.xlu0 %1434, %v1181
  %v1436 = vpop.permute.xlu0 %1435
  %1439 = vset.pattern.permute.xlu0 0
  %1440 = vperm.xlu0 %1439, %v1182
  %v1441 = vpop.permute.xlu0 %1440
  %1444 = vset.pattern.permute.xlu0 0
  %1445 = vperm.xlu0 %1444, %v1183
  %v1446 = vpop.permute.xlu0 %1445
  %1449 = vset.pattern.permute.xlu0 0
  %1450 = vperm.xlu0 %1449, %v1184
  %v1451 = vpop.permute.xlu0 %1450
  %1454 = vset.pattern.permute.xlu0 0
  %1455 = vperm.xlu0 %1454, %v1185
  %v1456 = vpop.permute.xlu0 %1455
  %1459 = vset.pattern.permute.xlu0 0
  %1460 = vperm.xlu0 %1459, %v1186
  %v1461 = vpop.permute.xlu0 %1460
  %1464 = vset.pattern.permute.xlu0 0
  %1465 = vperm.xlu0 %1464, %v1187
  %v1466 = vpop.permute.xlu0 %1465
  %1469 = vset.pattern.permute.xlu0 0
  %1470 = vperm.xlu0 %1469, %v1188
  %v1471 = vpop.permute.xlu0 %1470
  %1474 = vset.pattern.permute.xlu0 0
  %1475 = vperm.xlu0 %1474, %v1189
  %v1476 = vpop.permute.xlu0 %1475
  %1479 = vset.pattern.permute.xlu0 0
  %1480 = vperm.xlu0 %1479, %v1190
  %v1481 = vpop.permute.xlu0 %1480
  %1484 = vset.pattern.permute.xlu0 0
  %1485 = vperm.xlu0 %1484, %v1191
  %v1486 = vpop.permute.xlu0 %1485
  %1489 = vset.pattern.permute.xlu0 0
  %1490 = vperm.xlu0 %1489, %v1192
  %v1491 = vpop.permute.xlu0 %1490
  %1494 = vset.pattern.permute.xlu0 0
  %1495 = vperm.xlu0 %1494, %v1193
  %v1496 = vpop.permute.xlu0 %1495
  %1499 = vset.pattern.permute.xlu0 0
  %1500 = vperm.xlu0 %1499, %v1194
  %v1501 = vpop.permute.xlu0 %1500
  %1504 = vset.pattern.permute.xlu0 0
  %1505 = vperm.xlu0 %1504, %v1195
  %v1506 = vpop.permute.xlu0 %1505
  %1509 = vset.pattern.permute.xlu0 0
  %1510 = vperm.xlu0 %1509, %v1196
  %v1511 = vpop.permute.xlu0 %1510
  %1514 = vset.pattern.permute.xlu0 0
  %1515 = vperm.xlu0 %1514, %v1197
  %v1516 = vpop.permute.xlu0 %1515
  %1519 = vset.pattern.permute.xlu0 0
  %1520 = vperm.xlu0 %1519, %v1198
  %v1521 = vpop.permute.xlu0 %1520
  %1524 = vset.pattern.permute.xlu0 0
  %1525 = vperm.xlu0 %1524, %v1199
  %v1526 = vpop.permute.xlu0 %1525
  %1529 = vset.pattern.permute.xlu0 0
  %1530 = vperm.xlu0 %1529, %v1200
  %v1531 = vpop.permute.xlu0 %1530
  %1534 = vset.pattern.permute.xlu0 0
  %1535 = vperm.xlu0 %1534, %v1201
  %v1536 = vpop.permute.xlu0 %1535
  %1539 = vset.pattern.permute.xlu0 0
  %1540 = vperm.xlu0 %1539, %v1202
  %v1541 = vpop.permute.xlu0 %1540
  %1544 = vset.pattern.permute.xlu0 0
  %1545 = vperm.xlu0 %1544, %v1203
  %v1546 = vpop.permute.xlu0 %1545
  %1549 = vset.pattern.permute.xlu0 0
  %1550 = vperm.xlu0 %1549, %v1204
  %v1551 = vpop.permute.xlu0 %1550
  %1554 = vset.pattern.permute.xlu0 0
  %1555 = vperm.xlu0 %1554, %v1205
  %v1556 = vpop.permute.xlu0 %1555
  %1559 = vset.pattern.permute.xlu0 0
  %1560 = vperm.xlu0 %1559, %v1206
  %v1561 = vpop.permute.xlu0 %1560
  %1564 = vset.pattern.permute.xlu0 0
  %1565 = vperm.xlu0 %1564, %v1207
  %v1566 = vpop.permute.xlu0 %1565
  %1569 = vset.pattern.permute.xlu0 0
  %1570 = vperm.xlu0 %1569, %v1208
  %v1571 = vpop.permute.xlu0 %1570
  %1574 = vset.pattern.permute.xlu0 0
  %1575 = vperm.xlu0 %1574, %v1209
  %v1576 = vpop.permute.xlu0 %1575
  %1579 = vset.pattern.permute.xlu0 0
  %1580 = vperm.xlu0 %1579, %v1210
  %v1581 = vpop.permute.xlu0 %1580
  %1584 = vset.pattern.permute.xlu0 0
  %1585 = vperm.xlu0 %1584, %v1211
  %v1586 = vpop.permute.xlu0 %1585
  %1589 = vset.pattern.permute.xlu0 0
  %1590 = vperm.xlu0 %1589, %v1212
  %v1591 = vpop.permute.xlu0 %1590
  %1594 = vset.pattern.permute.xlu0 0
  %1595 = vperm.xlu0 %1594, %v1213
  %v1596 = vpop.permute.xlu0 %1595
  %1599 = vset.pattern.permute.xlu0 0
  %1600 = vperm.xlu0 %1599, %v1214
  %v1601 = vpop.permute.xlu0 %1600
  %1604 = vset.pattern.permute.xlu0 0
  %1605 = vperm.xlu0 %1604, %v1215
  %v1606 = vpop.permute.xlu0 %1605
  %1609 = vset.pattern.permute.xlu0 0
  %1610 = vperm.xlu0 %1609, %v1216
  %v1611 = vpop.permute.xlu0 %1610
  %1614 = vset.pattern.permute.xlu0 0
  %1615 = vperm.xlu0 %1614, %v1217
  %v1616 = vpop.permute.xlu0 %1615
  %v1618 = vmul.f32 %v418, %v1221
  %v1619 = vmul.f32 %v419, %v1226
  %v1620 = vmul.f32 %v420, %v1231
  %v1621 = vmul.f32 %v421, %v1236
  %v1622 = vmul.f32 %v422, %v1241
  %v1623 = vmul.f32 %v423, %v1246
  %v1624 = vmul.f32 %v424, %v1251
  %v1625 = vmul.f32 %v425, %v1256
  %v1626 = vmul.f32 %v426, %v1261
  %v1627 = vmul.f32 %v427, %v1266
  %v1628 = vmul.f32 %v428, %v1271
  %v1629 = vmul.f32 %v429, %v1276
  %v1630 = vmul.f32 %v430, %v1281
  %v1631 = vmul.f32 %v431, %v1286
  %v1632 = vmul.f32 %v432, %v1291
  %v1633 = vmul.f32 %v433, %v1296
  %v1634 = vmul.f32 %v434, %v1301
  %v1635 = vmul.f32 %v435, %v1306
  %v1636 = vmul.f32 %v436, %v1311
  %v1637 = vmul.f32 %v437, %v1316
  %v1638 = vmul.f32 %v438, %v1321
  %v1639 = vmul.f32 %v439, %v1326
  %v1640 = vmul.f32 %v440, %v1331
  %v1641 = vmul.f32 %v441, %v1336
  %v1642 = vmul.f32 %v442, %v1341
  %v1643 = vmul.f32 %v443, %v1346
  %v1644 = vmul.f32 %v444, %v1351
  %v1645 = vmul.f32 %v445, %v1356
  %v1646 = vmul.f32 %v446, %v1361
  %v1647 = vmul.f32 %v447, %v1366
  %v1648 = vmul.f32 %v448, %v1371
  %v1649 = vmul.f32 %v449, %v1376
  %v1650 = vmul.f32 %v450, %v1381
  %v1651 = vmul.f32 %v451, %v1386
  %v1652 = vmul.f32 %v452, %v1391
  %v1653 = vmul.f32 %v453, %v1396
  %v1654 = vmul.f32 %v454, %v1401
  %v1655 = vmul.f32 %v455, %v1406
  %v1656 = vmul.f32 %v456, %v1411
  %v1657 = vmul.f32 %v457, %v1416
  %v1658 = vmul.f32 %v458, %v1421
  %v1659 = vmul.f32 %v459, %v1426
  %v1660 = vmul.f32 %v460, %v1431
  %v1661 = vmul.f32 %v461, %v1436
  %v1662 = vmul.f32 %v462, %v1441
  %v1663 = vmul.f32 %v463, %v1446
  %v1664 = vmul.f32 %v464, %v1451
  %v1665 = vmul.f32 %v465, %v1456
  %v1666 = vmul.f32 %v466, %v1461
  %v1667 = vmul.f32 %v467, %v1466
  %v1668 = vmul.f32 %v468, %v1471
  %v1669 = vmul.f32 %v469, %v1476
  %v1670 = vmul.f32 %v470, %v1481
  %v1671 = vmul.f32 %v471, %v1486
  %v1672 = vmul.f32 %v472, %v1491
  %v1673 = vmul.f32 %v473, %v1496
  %v1674 = vmul.f32 %v474, %v1501
  %v1675 = vmul.f32 %v475, %v1506
  %v1676 = vmul.f32 %v476, %v1511
  %v1677 = vmul.f32 %v477, %v1516
  %v1678 = vmul.f32 %v478, %v1521
  %v1679 = vmul.f32 %v479, %v1526
  %v1680 = vmul.f32 %v480, %v1531
  %v1681 = vmul.f32 %v481, %v1536
  %v1682 = vmul.f32 %v482, %v1541
  %v1683 = vmul.f32 %v483, %v1546
  %v1684 = vmul.f32 %v484, %v1551
  %v1685 = vmul.f32 %v485, %v1556
  %v1686 = vmul.f32 %v486, %v1561
  %v1687 = vmul.f32 %v487, %v1566
  %v1688 = vmul.f32 %v488, %v1571
  %v1689 = vmul.f32 %v489, %v1576
  %v1690 = vmul.f32 %v490, %v1581
  %v1691 = vmul.f32 %v491, %v1586
  %v1692 = vmul.f32 %v492, %v1591
  %v1693 = vmul.f32 %v493, %v1596
  %v1694 = vmul.f32 %v494, %v1601
  %v1695 = vmul.f32 %v495, %v1606
  %v1696 = vmul.f32 %v496, %v1611
  %v1697 = vmul.f32 %v497, %v1616
  %v1698 = vld [vmem:[%s2] sm:$0xff]
  %v1699 = vld [vmem:[%s2 + $0x8] sm:$0xff]
  %v1700 = vld [vmem:[%s2 + $0x10] sm:$0xff]
  %v1701 = vld [vmem:[%s2 + $0x18] sm:$0xff]
  %v1702 = vld [vmem:[%s2 + $0x20] sm:$0xff]
  %v1703 = vld [vmem:[%s2 + $0x28] sm:$0xff]
  %v1704 = vld [vmem:[%s2 + $0x30] sm:$0xff]
  %v1705 = vld [vmem:[%s2 + $0x38] sm:$0xff]
  %v1706 = vld [vmem:[%s2 + $0x40] sm:$0xff]
  %v1707 = vld [vmem:[%s2 + $0x48] sm:$0xff]
  %v1708 = vld [vmem:[%s2 + $0x50] sm:$0xff]
  %v1709 = vld [vmem:[%s2 + $0x58] sm:$0xff]
  %v1710 = vld [vmem:[%s2 + $0x60] sm:$0xff]
  %v1711 = vld [vmem:[%s2 + $0x68] sm:$0xff]
  %v1712 = vld [vmem:[%s2 + $0x70] sm:$0xff]
  %v1713 = vld [vmem:[%s2 + $0x78] sm:$0xff]
  %v1714 = vld [vmem:[%s2 + $0x80] sm:$0xff]
  %v1715 = vld [vmem:[%s2 + $0x88] sm:$0xff]
  %v1716 = vld [vmem:[%s2 + $0x90] sm:$0xff]
  %v1717 = vld [vmem:[%s2 + $0x98] sm:$0xff]
  %v1718 = vld [vmem:[%s2 + $0xa0] sm:$0xff]
  %v1719 = vld [vmem:[%s2 + $0xa8] sm:$0xff]
  %v1720 = vld [vmem:[%s2 + $0xb0] sm:$0xff]
  %v1721 = vld [vmem:[%s2 + $0xb8] sm:$0xff]
  %v1722 = vld [vmem:[%s2 + $0xc0] sm:$0xff]
  %v1723 = vld [vmem:[%s2 + $0xc8] sm:$0xff]
  %v1724 = vld [vmem:[%s2 + $0xd0] sm:$0xff]
  %v1725 = vld [vmem:[%s2 + $0xd8] sm:$0xff]
  %v1726 = vld [vmem:[%s2 + $0xe0] sm:$0xff]
  %v1727 = vld [vmem:[%s2 + $0xe8] sm:$0xff]
  %v1728 = vld [vmem:[%s2 + $0xf0] sm:$0xff]
  %v1729 = vld [vmem:[%s2 + $0xf8] sm:$0xff]
  %v1730 = vld [vmem:[%s2 + $0x100] sm:$0xff]
  %v1731 = vld [vmem:[%s2 + $0x108] sm:$0xff]
  %v1732 = vld [vmem:[%s2 + $0x110] sm:$0xff]
  %v1733 = vld [vmem:[%s2 + $0x118] sm:$0xff]
  %v1734 = vld [vmem:[%s2 + $0x120] sm:$0xff]
  %v1735 = vld [vmem:[%s2 + $0x128] sm:$0xff]
  %v1736 = vld [vmem:[%s2 + $0x130] sm:$0xff]
  %v1737 = vld [vmem:[%s2 + $0x138] sm:$0xff]
  %v1738 = vld [vmem:[%s2 + $0x140] sm:$0xff]
  %v1739 = vld [vmem:[%s2 + $0x148] sm:$0xff]
  %v1740 = vld [vmem:[%s2 + $0x150] sm:$0xff]
  %v1741 = vld [vmem:[%s2 + $0x158] sm:$0xff]
  %v1742 = vld [vmem:[%s2 + $0x160] sm:$0xff]
  %v1743 = vld [vmem:[%s2 + $0x168] sm:$0xff]
  %v1744 = vld [vmem:[%s2 + $0x170] sm:$0xff]
  %v1745 = vld [vmem:[%s2 + $0x178] sm:$0xff]
  %v1746 = vld [vmem:[%s2 + $0x180] sm:$0xff]
  %v1747 = vld [vmem:[%s2 + $0x188] sm:$0xff]
  %v1748 = vld [vmem:[%s2 + $0x190] sm:$0xff]
  %v1749 = vld [vmem:[%s2 + $0x198] sm:$0xff]
  %v1750 = vld [vmem:[%s2 + $0x1a0] sm:$0xff]
  %v1751 = vld [vmem:[%s2 + $0x1a8] sm:$0xff]
  %v1752 = vld [vmem:[%s2 + $0x1b0] sm:$0xff]
  %v1753 = vld [vmem:[%s2 + $0x1b8] sm:$0xff]
  %v1754 = vld [vmem:[%s2 + $0x1c0] sm:$0xff]
  %v1755 = vld [vmem:[%s2 + $0x1c8] sm:$0xff]
  %v1756 = vld [vmem:[%s2 + $0x1d0] sm:$0xff]
  %v1757 = vld [vmem:[%s2 + $0x1d8] sm:$0xff]
  %v1758 = vld [vmem:[%s2 + $0x1e0] sm:$0xff]
  %v1759 = vld [vmem:[%s2 + $0x1e8] sm:$0xff]
  %v1760 = vld [vmem:[%s2 + $0x1f0] sm:$0xff]
  %v1761 = vld [vmem:[%s2 + $0x1f8] sm:$0xff]
  %v1762 = vld [vmem:[%s2 + $0x200] sm:$0xff]
  %v1763 = vld [vmem:[%s2 + $0x208] sm:$0xff]
  %v1764 = vld [vmem:[%s2 + $0x210] sm:$0xff]
  %v1765 = vld [vmem:[%s2 + $0x218] sm:$0xff]
  %v1766 = vld [vmem:[%s2 + $0x220] sm:$0xff]
  %v1767 = vld [vmem:[%s2 + $0x228] sm:$0xff]
  %v1768 = vld [vmem:[%s2 + $0x230] sm:$0xff]
  %v1769 = vld [vmem:[%s2 + $0x238] sm:$0xff]
  %v1770 = vld [vmem:[%s2 + $0x240] sm:$0xff]
  %v1771 = vld [vmem:[%s2 + $0x248] sm:$0xff]
  %v1772 = vld [vmem:[%s2 + $0x250] sm:$0xff]
  %v1773 = vld [vmem:[%s2 + $0x258] sm:$0xff]
  %v1774 = vld [vmem:[%s2 + $0x260] sm:$0xff]
  %v1775 = vld [vmem:[%s2 + $0x268] sm:$0xff]
  %v1776 = vld [vmem:[%s2 + $0x270] sm:$0xff]
  %v1777 = vld [vmem:[%s2 + $0x278] sm:$0xff]
  %1779 = vset.pattern.permute.xlu0 0
  %1780 = vperm.xlu0 %1779, %v1698
  %v1781 = vpop.permute.xlu0 %1780
  %1784 = vset.pattern.permute.xlu0 0
  %1785 = vperm.xlu0 %1784, %v1699
  %v1786 = vpop.permute.xlu0 %1785
  %1789 = vset.pattern.permute.xlu0 0
  %1790 = vperm.xlu0 %1789, %v1700
  %v1791 = vpop.permute.xlu0 %1790
  %1794 = vset.pattern.permute.xlu0 0
  %1795 = vperm.xlu0 %1794, %v1701
  %v1796 = vpop.permute.xlu0 %1795
  %1799 = vset.pattern.permute.xlu0 0
  %1800 = vperm.xlu0 %1799, %v1702
  %v1801 = vpop.permute.xlu0 %1800
  %1804 = vset.pattern.permute.xlu0 0
  %1805 = vperm.xlu0 %1804, %v1703
  %v1806 = vpop.permute.xlu0 %1805
  %1809 = vset.pattern.permute.xlu0 0
  %1810 = vperm.xlu0 %1809, %v1704
  %v1811 = vpop.permute.xlu0 %1810
  %1814 = vset.pattern.permute.xlu0 0
  %1815 = vperm.xlu0 %1814, %v1705
  %v1816 = vpop.permute.xlu0 %1815
  %1819 = vset.pattern.permute.xlu0 0
  %1820 = vperm.xlu0 %1819, %v1706
  %v1821 = vpop.permute.xlu0 %1820
  %1824 = vset.pattern.permute.xlu0 0
  %1825 = vperm.xlu0 %1824, %v1707
  %v1826 = vpop.permute.xlu0 %1825
  %1829 = vset.pattern.permute.xlu0 0
  %1830 = vperm.xlu0 %1829, %v1708
  %v1831 = vpop.permute.xlu0 %1830
  %1834 = vset.pattern.permute.xlu0 0
  %1835 = vperm.xlu0 %1834, %v1709
  %v1836 = vpop.permute.xlu0 %1835
  %1839 = vset.pattern.permute.xlu0 0
  %1840 = vperm.xlu0 %1839, %v1710
  %v1841 = vpop.permute.xlu0 %1840
  %1844 = vset.pattern.permute.xlu0 0
  %1845 = vperm.xlu0 %1844, %v1711
  %v1846 = vpop.permute.xlu0 %1845
  %1849 = vset.pattern.permute.xlu0 0
  %1850 = vperm.xlu0 %1849, %v1712
  %v1851 = vpop.permute.xlu0 %1850
  %1854 = vset.pattern.permute.xlu0 0
  %1855 = vperm.xlu0 %1854, %v1713
  %v1856 = vpop.permute.xlu0 %1855
  %1859 = vset.pattern.permute.xlu0 0
  %1860 = vperm.xlu0 %1859, %v1714
  %v1861 = vpop.permute.xlu0 %1860
  %1864 = vset.pattern.permute.xlu0 0
  %1865 = vperm.xlu0 %1864, %v1715
  %v1866 = vpop.permute.xlu0 %1865
  %1869 = vset.pattern.permute.xlu0 0
  %1870 = vperm.xlu0 %1869, %v1716
  %v1871 = vpop.permute.xlu0 %1870
  %1874 = vset.pattern.permute.xlu0 0
  %1875 = vperm.xlu0 %1874, %v1717
  %v1876 = vpop.permute.xlu0 %1875
  %1879 = vset.pattern.permute.xlu0 0
  %1880 = vperm.xlu0 %1879, %v1718
  %v1881 = vpop.permute.xlu0 %1880
  %1884 = vset.pattern.permute.xlu0 0
  %1885 = vperm.xlu0 %1884, %v1719
  %v1886 = vpop.permute.xlu0 %1885
  %1889 = vset.pattern.permute.xlu0 0
  %1890 = vperm.xlu0 %1889, %v1720
  %v1891 = vpop.permute.xlu0 %1890
  %1894 = vset.pattern.permute.xlu0 0
  %1895 = vperm.xlu0 %1894, %v1721
  %v1896 = vpop.permute.xlu0 %1895
  %1899 = vset.pattern.permute.xlu0 0
  %1900 = vperm.xlu0 %1899, %v1722
  %v1901 = vpop.permute.xlu0 %1900
  %1904 = vset.pattern.permute.xlu0 0
  %1905 = vperm.xlu0 %1904, %v1723
  %v1906 = vpop.permute.xlu0 %1905
  %1909 = vset.pattern.permute.xlu0 0
  %1910 = vperm.xlu0 %1909, %v1724
  %v1911 = vpop.permute.xlu0 %1910
  %1914 = vset.pattern.permute.xlu0 0
  %1915 = vperm.xlu0 %1914, %v1725
  %v1916 = vpop.permute.xlu0 %1915
  %1919 = vset.pattern.permute.xlu0 0
  %1920 = vperm.xlu0 %1919, %v1726
  %v1921 = vpop.permute.xlu0 %1920
  %1924 = vset.pattern.permute.xlu0 0
  %1925 = vperm.xlu0 %1924, %v1727
  %v1926 = vpop.permute.xlu0 %1925
  %1929 = vset.pattern.permute.xlu0 0
  %1930 = vperm.xlu0 %1929, %v1728
  %v1931 = vpop.permute.xlu0 %1930
  %1934 = vset.pattern.permute.xlu0 0
  %1935 = vperm.xlu0 %1934, %v1729
  %v1936 = vpop.permute.xlu0 %1935
  %1939 = vset.pattern.permute.xlu0 0
  %1940 = vperm.xlu0 %1939, %v1730
  %v1941 = vpop.permute.xlu0 %1940
  %1944 = vset.pattern.permute.xlu0 0
  %1945 = vperm.xlu0 %1944, %v1731
  %v1946 = vpop.permute.xlu0 %1945
  %1949 = vset.pattern.permute.xlu0 0
  %1950 = vperm.xlu0 %1949, %v1732
  %v1951 = vpop.permute.xlu0 %1950
  %1954 = vset.pattern.permute.xlu0 0
  %1955 = vperm.xlu0 %1954, %v1733
  %v1956 = vpop.permute.xlu0 %1955
  %1959 = vset.pattern.permute.xlu0 0
  %1960 = vperm.xlu0 %1959, %v1734
  %v1961 = vpop.permute.xlu0 %1960
  %1964 = vset.pattern.permute.xlu0 0
  %1965 = vperm.xlu0 %1964, %v1735
  %v1966 = vpop.permute.xlu0 %1965
  %1969 = vset.pattern.permute.xlu0 0
  %1970 = vperm.xlu0 %1969, %v1736
  %v1971 = vpop.permute.xlu0 %1970
  %1974 = vset.pattern.permute.xlu0 0
  %1975 = vperm.xlu0 %1974, %v1737
  %v1976 = vpop.permute.xlu0 %1975
  %1979 = vset.pattern.permute.xlu0 0
  %1980 = vperm.xlu0 %1979, %v1738
  %v1981 = vpop.permute.xlu0 %1980
  %1984 = vset.pattern.permute.xlu0 0
  %1985 = vperm.xlu0 %1984, %v1739
  %v1986 = vpop.permute.xlu0 %1985
  %1989 = vset.pattern.permute.xlu0 0
  %1990 = vperm.xlu0 %1989, %v1740
  %v1991 = vpop.permute.xlu0 %1990
  %1994 = vset.pattern.permute.xlu0 0
  %1995 = vperm.xlu0 %1994, %v1741
  %v1996 = vpop.permute.xlu0 %1995
  %1999 = vset.pattern.permute.xlu0 0
  %2000 = vperm.xlu0 %1999, %v1742
  %v2001 = vpop.permute.xlu0 %2000
  %2004 = vset.pattern.permute.xlu0 0
  %2005 = vperm.xlu0 %2004, %v1743
  %v2006 = vpop.permute.xlu0 %2005
  %2009 = vset.pattern.permute.xlu0 0
  %2010 = vperm.xlu0 %2009, %v1744
  %v2011 = vpop.permute.xlu0 %2010
  %2014 = vset.pattern.permute.xlu0 0
  %2015 = vperm.xlu0 %2014, %v1745
  %v2016 = vpop.permute.xlu0 %2015
  %2019 = vset.pattern.permute.xlu0 0
  %2020 = vperm.xlu0 %2019, %v1746
  %v2021 = vpop.permute.xlu0 %2020
  %2024 = vset.pattern.permute.xlu0 0
  %2025 = vperm.xlu0 %2024, %v1747
  %v2026 = vpop.permute.xlu0 %2025
  %2029 = vset.pattern.permute.xlu0 0
  %2030 = vperm.xlu0 %2029, %v1748
  %v2031 = vpop.permute.xlu0 %2030
  %2034 = vset.pattern.permute.xlu0 0
  %2035 = vperm.xlu0 %2034, %v1749
  %v2036 = vpop.permute.xlu0 %2035
  %2039 = vset.pattern.permute.xlu0 0
  %2040 = vperm.xlu0 %2039, %v1750
  %v2041 = vpop.permute.xlu0 %2040
  %2044 = vset.pattern.permute.xlu0 0
  %2045 = vperm.xlu0 %2044, %v1751
  %v2046 = vpop.permute.xlu0 %2045
  %2049 = vset.pattern.permute.xlu0 0
  %2050 = vperm.xlu0 %2049, %v1752
  %v2051 = vpop.permute.xlu0 %2050
  %2054 = vset.pattern.permute.xlu0 0
  %2055 = vperm.xlu0 %2054, %v1753
  %v2056 = vpop.permute.xlu0 %2055
  %2059 = vset.pattern.permute.xlu0 0
  %2060 = vperm.xlu0 %2059, %v1754
  %v2061 = vpop.permute.xlu0 %2060
  %2064 = vset.pattern.permute.xlu0 0
  %2065 = vperm.xlu0 %2064, %v1755
  %v2066 = vpop.permute.xlu0 %2065
  %2069 = vset.pattern.permute.xlu0 0
  %2070 = vperm.xlu0 %2069, %v1756
  %v2071 = vpop.permute.xlu0 %2070
  %2074 = vset.pattern.permute.xlu0 0
  %2075 = vperm.xlu0 %2074, %v1757
  %v2076 = vpop.permute.xlu0 %2075
  %2079 = vset.pattern.permute.xlu0 0
  %2080 = vperm.xlu0 %2079, %v1758
  %v2081 = vpop.permute.xlu0 %2080
  %2084 = vset.pattern.permute.xlu0 0
  %2085 = vperm.xlu0 %2084, %v1759
  %v2086 = vpop.permute.xlu0 %2085
  %2089 = vset.pattern.permute.xlu0 0
  %2090 = vperm.xlu0 %2089, %v1760
  %v2091 = vpop.permute.xlu0 %2090
  %2094 = vset.pattern.permute.xlu0 0
  %2095 = vperm.xlu0 %2094, %v1761
  %v2096 = vpop.permute.xlu0 %2095
  %2099 = vset.pattern.permute.xlu0 0
  %2100 = vperm.xlu0 %2099, %v1762
  %v2101 = vpop.permute.xlu0 %2100
  %2104 = vset.pattern.permute.xlu0 0
  %2105 = vperm.xlu0 %2104, %v1763
  %v2106 = vpop.permute.xlu0 %2105
  %2109 = vset.pattern.permute.xlu0 0
  %2110 = vperm.xlu0 %2109, %v1764
  %v2111 = vpop.permute.xlu0 %2110
  %2114 = vset.pattern.permute.xlu0 0
  %2115 = vperm.xlu0 %2114, %v1765
  %v2116 = vpop.permute.xlu0 %2115
  %2119 = vset.pattern.permute.xlu0 0
  %2120 = vperm.xlu0 %2119, %v1766
  %v2121 = vpop.permute.xlu0 %2120
  %2124 = vset.pattern.permute.xlu0 0
  %2125 = vperm.xlu0 %2124, %v1767
  %v2126 = vpop.permute.xlu0 %2125
  %2129 = vset.pattern.permute.xlu0 0
  %2130 = vperm.xlu0 %2129, %v1768
  %v2131 = vpop.permute.xlu0 %2130
  %2134 = vset.pattern.permute.xlu0 0
  %2135 = vperm.xlu0 %2134, %v1769
  %v2136 = vpop.permute.xlu0 %2135
  %2139 = vset.pattern.permute.xlu0 0
  %2140 = vperm.xlu0 %2139, %v1770
  %v2141 = vpop.permute.xlu0 %2140
  %2144 = vset.pattern.permute.xlu0 0
  %2145 = vperm.xlu0 %2144, %v1771
  %v2146 = vpop.permute.xlu0 %2145
  %2149 = vset.pattern.permute.xlu0 0
  %2150 = vperm.xlu0 %2149, %v1772
  %v2151 = vpop.permute.xlu0 %2150
  %2154 = vset.pattern.permute.xlu0 0
  %2155 = vperm.xlu0 %2154, %v1773
  %v2156 = vpop.permute.xlu0 %2155
  %2159 = vset.pattern.permute.xlu0 0
  %2160 = vperm.xlu0 %2159, %v1774
  %v2161 = vpop.permute.xlu0 %2160
  %2164 = vset.pattern.permute.xlu0 0
  %2165 = vperm.xlu0 %2164, %v1775
  %v2166 = vpop.permute.xlu0 %2165
  %2169 = vset.pattern.permute.xlu0 0
  %2170 = vperm.xlu0 %2169, %v1776
  %v2171 = vpop.permute.xlu0 %2170
  %2174 = vset.pattern.permute.xlu0 0
  %2175 = vperm.xlu0 %2174, %v1777
  %v2176 = vpop.permute.xlu0 %2175
  %v2178 = vadd.f32 %v1618, %v1781
  %v2179 = vadd.f32 %v1619, %v1786
  %v2180 = vadd.f32 %v1620, %v1791
  %v2181 = vadd.f32 %v1621, %v1796
  %v2182 = vadd.f32 %v1622, %v1801
  %v2183 = vadd.f32 %v1623, %v1806
  %v2184 = vadd.f32 %v1624, %v1811
  %v2185 = vadd.f32 %v1625, %v1816
  %v2186 = vadd.f32 %v1626, %v1821
  %v2187 = vadd.f32 %v1627, %v1826
  %v2188 = vadd.f32 %v1628, %v1831
  %v2189 = vadd.f32 %v1629, %v1836
  %v2190 = vadd.f32 %v1630, %v1841
  %v2191 = vadd.f32 %v1631, %v1846
  %v2192 = vadd.f32 %v1632, %v1851
  %v2193 = vadd.f32 %v1633, %v1856
  %v2194 = vadd.f32 %v1634, %v1861
  %v2195 = vadd.f32 %v1635, %v1866
  %v2196 = vadd.f32 %v1636, %v1871
  %v2197 = vadd.f32 %v1637, %v1876
  %v2198 = vadd.f32 %v1638, %v1881
  %v2199 = vadd.f32 %v1639, %v1886
  %v2200 = vadd.f32 %v1640, %v1891
  %v2201 = vadd.f32 %v1641, %v1896
  %v2202 = vadd.f32 %v1642, %v1901
  %v2203 = vadd.f32 %v1643, %v1906
  %v2204 = vadd.f32 %v1644, %v1911
  %v2205 = vadd.f32 %v1645, %v1916
  %v2206 = vadd.f32 %v1646, %v1921
  %v2207 = vadd.f32 %v1647, %v1926
  %v2208 = vadd.f32 %v1648, %v1931
  %v2209 = vadd.f32 %v1649, %v1936
  %v2210 = vadd.f32 %v1650, %v1941
  %v2211 = vadd.f32 %v1651, %v1946
  %v2212 = vadd.f32 %v1652, %v1951
  %v2213 = vadd.f32 %v1653, %v1956
  %v2214 = vadd.f32 %v1654, %v1961
  %v2215 = vadd.f32 %v1655, %v1966
  %v2216 = vadd.f32 %v1656, %v1971
  %v2217 = vadd.f32 %v1657, %v1976
  %v2218 = vadd.f32 %v1658, %v1981
  %v2219 = vadd.f32 %v1659, %v1986
  %v2220 = vadd.f32 %v1660, %v1991
  %v2221 = vadd.f32 %v1661, %v1996
  %v2222 = vadd.f32 %v1662, %v2001
  %v2223 = vadd.f32 %v1663, %v2006
  %v2224 = vadd.f32 %v1664, %v2011
  %v2225 = vadd.f32 %v1665, %v2016
  %v2226 = vadd.f32 %v1666, %v2021
  %v2227 = vadd.f32 %v1667, %v2026
  %v2228 = vadd.f32 %v1668, %v2031
  %v2229 = vadd.f32 %v1669, %v2036
  %v2230 = vadd.f32 %v1670, %v2041
  %v2231 = vadd.f32 %v1671, %v2046
  %v2232 = vadd.f32 %v1672, %v2051
  %v2233 = vadd.f32 %v1673, %v2056
  %v2234 = vadd.f32 %v1674, %v2061
  %v2235 = vadd.f32 %v1675, %v2066
  %v2236 = vadd.f32 %v1676, %v2071
  %v2237 = vadd.f32 %v1677, %v2076
  %v2238 = vadd.f32 %v1678, %v2081
  %v2239 = vadd.f32 %v1679, %v2086
  %v2240 = vadd.f32 %v1680, %v2091
  %v2241 = vadd.f32 %v1681, %v2096
  %v2242 = vadd.f32 %v1682, %v2101
  %v2243 = vadd.f32 %v1683, %v2106
  %v2244 = vadd.f32 %v1684, %v2111
  %v2245 = vadd.f32 %v1685, %v2116
  %v2246 = vadd.f32 %v1686, %v2121
  %v2247 = vadd.f32 %v1687, %v2126
  %v2248 = vadd.f32 %v1688, %v2131
  %v2249 = vadd.f32 %v1689, %v2136
  %v2250 = vadd.f32 %v1690, %v2141
  %v2251 = vadd.f32 %v1691, %v2146
  %v2252 = vadd.f32 %v1692, %v2151
  %v2253 = vadd.f32 %v1693, %v2156
  %v2254 = vadd.f32 %v1694, %v2161
  %v2255 = vadd.f32 %v1695, %v2166
  %v2256 = vadd.f32 %v1696, %v2171
  %v2257 = vadd.f32 %v1697, %v2176
  %v2258 = vmax.f32 %v2178, 0.0
  %v2259 = vmax.f32 %v2179, 0.0
  %v2260 = vmax.f32 %v2180, 0.0
  %v2261 = vmax.f32 %v2181, 0.0
  %v2262 = vmax.f32 %v2182, 0.0
  %v2263 = vmax.f32 %v2183, 0.0
  %v2264 = vmax.f32 %v2184, 0.0
  %v2265 = vmax.f32 %v2185, 0.0
  %v2266 = vmax.f32 %v2186, 0.0
  %v2267 = vmax.f32 %v2187, 0.0
  %v2268 = vmax.f32 %v2188, 0.0
  %v2269 = vmax.f32 %v2189, 0.0
  %v2270 = vmax.f32 %v2190, 0.0
  %v2271 = vmax.f32 %v2191, 0.0
  %v2272 = vmax.f32 %v2192, 0.0
  %v2273 = vmax.f32 %v2193, 0.0
  %v2274 = vmax.f32 %v2194, 0.0
  %v2275 = vmax.f32 %v2195, 0.0
  %v2276 = vmax.f32 %v2196, 0.0
  %v2277 = vmax.f32 %v2197, 0.0
  %v2278 = vmax.f32 %v2198, 0.0
  %v2279 = vmax.f32 %v2199, 0.0
  %v2280 = vmax.f32 %v2200, 0.0
  %v2281 = vmax.f32 %v2201, 0.0
  %v2282 = vmax.f32 %v2202, 0.0
  %v2283 = vmax.f32 %v2203, 0.0
  %v2284 = vmax.f32 %v2204, 0.0
  %v2285 = vmax.f32 %v2205, 0.0
  %v2286 = vmax.f32 %v2206, 0.0
  %v2287 = vmax.f32 %v2207, 0.0
  %v2288 = vmax.f32 %v2208, 0.0
  %v2289 = vmax.f32 %v2209, 0.0
  %v2290 = vmax.f32 %v2210, 0.0
  %v2291 = vmax.f32 %v2211, 0.0
  %v2292 = vmax.f32 %v2212, 0.0
  %v2293 = vmax.f32 %v2213, 0.0
  %v2294 = vmax.f32 %v2214, 0.0
  %v2295 = vmax.f32 %v2215, 0.0
  %v2296 = vmax.f32 %v2216, 0.0
  %v2297 = vmax.f32 %v2217, 0.0
  %v2298 = vmax.f32 %v2218, 0.0
  %v2299 = vmax.f32 %v2219, 0.0
  %v2300 = vmax.f32 %v2220, 0.0
  %v2301 = vmax.f32 %v2221, 0.0
  %v2302 = vmax.f32 %v2222, 0.0
  %v2303 = vmax.f32 %v2223, 0.0
  %v2304 = vmax.f32 %v2224, 0.0
  %v2305 = vmax.f32 %v2225, 0.0
  %v2306 = vmax.f32 %v2226, 0.0
  %v2307 = vmax.f32 %v2227, 0.0
  %v2308 = vmax.f32 %v2228, 0.0
  %v2309 = vmax.f32 %v2229, 0.0
  %v2310 = vmax.f32 %v2230, 0.0
  %v2311 = vmax.f32 %v2231, 0.0
  %v2312 = vmax.f32 %v2232, 0.0
  %v2313 = vmax.f32 %v2233, 0.0
  %v2314 = vmax.f32 %v2234, 0.0
  %v2315 = vmax.f32 %v2235, 0.0
  %v2316 = vmax.f32 %v2236, 0.0
  %v2317 = vmax.f32 %v2237, 0.0
  %v2318 = vmax.f32 %v2238, 0.0
  %v2319 = vmax.f32 %v2239, 0.0
  %v2320 = vmax.f32 %v2240, 0.0
  %v2321 = vmax.f32 %v2241, 0.0
  %v2322 = vmax.f32 %v2242, 0.0
  %v2323 = vmax.f32 %v2243, 0.0
  %v2324 = vmax.f32 %v2244, 0.0
  %v2325 = vmax.f32 %v2245, 0.0
  %v2326 = vmax.f32 %v2246, 0.0
  %v2327 = vmax.f32 %v2247, 0.0
  %v2328 = vmax.f32 %v2248, 0.0
  %v2329 = vmax.f32 %v2249, 0.0
  %v2330 = vmax.f32 %v2250, 0.0
  %v2331 = vmax.f32 %v2251, 0.0
  %v2332 = vmax.f32 %v2252, 0.0
  %v2333 = vmax.f32 %v2253, 0.0
  %v2334 = vmax.f32 %v2254, 0.0
  %v2335 = vmax.f32 %v2255, 0.0
  %v2336 = vmax.f32 %v2256, 0.0
  %v2337 = vmax.f32 %v2257, 0.0
  %v2338 = vld [vmem:[%s3] sm:$0xff]
  %v2339 = vld [vmem:[%s3 + $0x8] sm:$0xff]
  %v2340 = vld [vmem:[%s3 + $0x10] sm:$0xff]
  %v2341 = vld [vmem:[%s3 + $0x18] sm:$0xff]
  %v2342 = vld [vmem:[%s3 + $0x20] sm:$0xff]
  %v2343 = vld [vmem:[%s3 + $0x28] sm:$0xff]
  %v2344 = vld [vmem:[%s3 + $0x30] sm:$0xff]
  %v2345 = vld [vmem:[%s3 + $0x38] sm:$0xff]
  %v2346 = vld [vmem:[%s3 + $0x40] sm:$0xff]
  %v2347 = vld [vmem:[%s3 + $0x48] sm:$0xff]
  %v2348 = vld [vmem:[%s3 + $0x50] sm:$0xff]
  %v2349 = vld [vmem:[%s3 + $0x58] sm:$0xff]
  %v2350 = vld [vmem:[%s3 + $0x60] sm:$0xff]
  %v2351 = vld [vmem:[%s3 + $0x68] sm:$0xff]
  %v2352 = vld [vmem:[%s3 + $0x70] sm:$0xff]
  %v2353 = vld [vmem:[%s3 + $0x78] sm:$0xff]
  %v2354 = vld [vmem:[%s3 + $0x80] sm:$0xff]
  %v2355 = vld [vmem:[%s3 + $0x88] sm:$0xff]
  %v2356 = vld [vmem:[%s3 + $0x90] sm:$0xff]
  %v2357 = vld [vmem:[%s3 + $0x98] sm:$0xff]
  %v2358 = vld [vmem:[%s3 + $0xa0] sm:$0xff]
  %v2359 = vld [vmem:[%s3 + $0xa8] sm:$0xff]
  %v2360 = vld [vmem:[%s3 + $0xb0] sm:$0xff]
  %v2361 = vld [vmem:[%s3 + $0xb8] sm:$0xff]
  %v2362 = vld [vmem:[%s3 + $0xc0] sm:$0xff]
  %v2363 = vld [vmem:[%s3 + $0xc8] sm:$0xff]
  %v2364 = vld [vmem:[%s3 + $0xd0] sm:$0xff]
  %v2365 = vld [vmem:[%s3 + $0xd8] sm:$0xff]
  %v2366 = vld [vmem:[%s3 + $0xe0] sm:$0xff]
  %v2367 = vld [vmem:[%s3 + $0xe8] sm:$0xff]
  %v2368 = vld [vmem:[%s3 + $0xf0] sm:$0xff]
  %v2369 = vld [vmem:[%s3 + $0xf8] sm:$0xff]
  %v2370 = vld [vmem:[%s3 + $0x100] sm:$0xff]
  %v2371 = vld [vmem:[%s3 + $0x108] sm:$0xff]
  %v2372 = vld [vmem:[%s3 + $0x110] sm:$0xff]
  %v2373 = vld [vmem:[%s3 + $0x118] sm:$0xff]
  %v2374 = vld [vmem:[%s3 + $0x120] sm:$0xff]
  %v2375 = vld [vmem:[%s3 + $0x128] sm:$0xff]
  %v2376 = vld [vmem:[%s3 + $0x130] sm:$0xff]
  %v2377 = vld [vmem:[%s3 + $0x138] sm:$0xff]
  %v2378 = vld [vmem:[%s3 + $0x140] sm:$0xff]
  %v2379 = vld [vmem:[%s3 + $0x148] sm:$0xff]
  %v2380 = vld [vmem:[%s3 + $0x150] sm:$0xff]
  %v2381 = vld [vmem:[%s3 + $0x158] sm:$0xff]
  %v2382 = vld [vmem:[%s3 + $0x160] sm:$0xff]
  %v2383 = vld [vmem:[%s3 + $0x168] sm:$0xff]
  %v2384 = vld [vmem:[%s3 + $0x170] sm:$0xff]
  %v2385 = vld [vmem:[%s3 + $0x178] sm:$0xff]
  %v2386 = vld [vmem:[%s3 + $0x180] sm:$0xff]
  %v2387 = vld [vmem:[%s3 + $0x188] sm:$0xff]
  %v2388 = vld [vmem:[%s3 + $0x190] sm:$0xff]
  %v2389 = vld [vmem:[%s3 + $0x198] sm:$0xff]
  %v2390 = vld [vmem:[%s3 + $0x1a0] sm:$0xff]
  %v2391 = vld [vmem:[%s3 + $0x1a8] sm:$0xff]
  %v2392 = vld [vmem:[%s3 + $0x1b0] sm:$0xff]
  %v2393 = vld [vmem:[%s3 + $0x1b8] sm:$0xff]
  %v2394 = vld [vmem:[%s3 + $0x1c0] sm:$0xff]
  %v2395 = vld [vmem:[%s3 + $0x1c8] sm:$0xff]
  %v2396 = vld [vmem:[%s3 + $0x1d0] sm:$0xff]
  %v2397 = vld [vmem:[%s3 + $0x1d8] sm:$0xff]
  %v2398 = vld [vmem:[%s3 + $0x1e0] sm:$0xff]
  %v2399 = vld [vmem:[%s3 + $0x1e8] sm:$0xff]
  %v2400 = vld [vmem:[%s3 + $0x1f0] sm:$0xff]
  %v2401 = vld [vmem:[%s3 + $0x1f8] sm:$0xff]
  %v2402 = vld [vmem:[%s3 + $0x200] sm:$0xff]
  %v2403 = vld [vmem:[%s3 + $0x208] sm:$0xff]
  %v2404 = vld [vmem:[%s3 + $0x210] sm:$0xff]
  %v2405 = vld [vmem:[%s3 + $0x218] sm:$0xff]
  %v2406 = vld [vmem:[%s3 + $0x220] sm:$0xff]
  %v2407 = vld [vmem:[%s3 + $0x228] sm:$0xff]
  %v2408 = vld [vmem:[%s3 + $0x230] sm:$0xff]
  %v2409 = vld [vmem:[%s3 + $0x238] sm:$0xff]
  %v2410 = vld [vmem:[%s3 + $0x240] sm:$0xff]
  %v2411 = vld [vmem:[%s3 + $0x248] sm:$0xff]
  %v2412 = vld [vmem:[%s3 + $0x250] sm:$0xff]
  %v2413 = vld [vmem:[%s3 + $0x258] sm:$0xff]
  %v2414 = vld [vmem:[%s3 + $0x260] sm:$0xff]
  %v2415 = vld [vmem:[%s3 + $0x268] sm:$0xff]
  %v2416 = vld [vmem:[%s3 + $0x270] sm:$0xff]
  %v2417 = vld [vmem:[%s3 + $0x278] sm:$0xff]
  %2418 = vmatprep.subr.mxu0 0.0
  %2419 = vmatpush1.msra.mxu0 %v2273
  %2420 = vmatprep.subr.mxu0 0.0
  %2421 = vmatpush1.msra.mxu0 %v2272
  %2422 = vmatprep.subr.mxu0 0.0
  %2423 = vmatpush1.msra.mxu0 %v2271
  %2424 = vmatprep.subr.mxu0 0.0
  %2425 = vmatpush1.msra.mxu0 %v2270
  %2426 = vmatprep.subr.mxu0 0.0
  %2427 = vmatpush1.msra.mxu0 %v2269
  %2428 = vmatprep.subr.mxu0 0.0
  %2429 = vmatpush1.msra.mxu0 %v2268
  %2430 = vmatprep.subr.mxu0 0.0
  %2431 = vmatpush1.msra.mxu0 %v2267
  %2432 = vmatprep.subr.mxu0 0.0
  %2433 = vmatpush1.msra.mxu0 %v2266
  %2434 = vmatprep.subr.mxu0 0.0
  %2435 = vmatpush1.msra.mxu0 %v2265
  %2436 = vmatprep.subr.mxu0 0.0
  %2437 = vmatpush1.msra.mxu0 %v2264
  %2438 = vmatprep.subr.mxu0 0.0
  %2439 = vmatpush1.msra.mxu0 %v2263
  %2440 = vmatprep.subr.mxu0 0.0
  %2441 = vmatpush1.msra.mxu0 %v2262
  %2442 = vmatprep.subr.mxu0 0.0
  %2443 = vmatpush1.msra.mxu0 %v2261
  %2444 = vmatprep.subr.mxu0 0.0
  %2445 = vmatpush1.msra.mxu0 %v2260
  %2446 = vmatprep.subr.mxu0 0.0
  %2447 = vmatpush1.msra.mxu0 %v2259
  %2448 = vmatprep.subr.mxu0 0.0
  %2449 = vmatpush1.msra.mxu0 %v2258
  %2450 = vmatprep.subr.mxu0 0.0
  %2451 = vmatpush2.msra.mxu0 %v2289
  %2452 = vmatprep.subr.mxu0 0.0
  %2453 = vmatpush2.msra.mxu0 %v2288
  %2454 = vmatprep.subr.mxu0 0.0
  %2455 = vmatpush2.msra.mxu0 %v2287
  %2456 = vmatprep.subr.mxu0 0.0
  %2457 = vmatpush2.msra.mxu0 %v2286
  %2458 = vmatprep.subr.mxu0 0.0
  %2459 = vmatpush2.msra.mxu0 %v2285
  %2460 = vmatprep.subr.mxu0 0.0
  %2461 = vmatpush2.msra.mxu0 %v2284
  %2462 = vmatprep.subr.mxu0 0.0
  %2463 = vmatpush2.msra.mxu0 %v2283
  %2464 = vmatprep.subr.mxu0 0.0
  %2465 = vmatpush2.msra.mxu0 %v2282
  %2466 = vmatprep.subr.mxu0 0.0
  %2467 = vmatpush2.msra.mxu0 %v2281
  %2468 = vmatprep.subr.mxu0 0.0
  %2469 = vmatpush2.msra.mxu0 %v2280
  %2470 = vmatprep.subr.mxu0 0.0
  %2471 = vmatpush2.msra.mxu0 %v2279
  %2472 = vmatprep.subr.mxu0 0.0
  %2473 = vmatpush2.msra.mxu0 %v2278
  %2474 = vmatprep.subr.mxu0 0.0
  %2475 = vmatpush2.msra.mxu0 %v2277
  %2476 = vmatprep.subr.mxu0 0.0
  %2477 = vmatpush2.msra.mxu0 %v2276
  %2478 = vmatprep.subr.mxu0 0.0
  %2479 = vmatpush2.msra.mxu0 %v2275
  %2480 = vmatprep.subr.mxu0 0.0
  %2481 = vmatpush2.msra.mxu0 %v2274
  %2482 = vmatprep.mubr.f32.mxu0 %v2339
  %2483 = vmatmul.mubr.f32.gmra.mxu0 %v2338
  %v2484 = vpop.f32.mrf.mxu0
  %v2485 = vadd.f32 0.0, %v2484
  %v2486 = vpop.f32.mrf.mxu0
  %2487 = vmatprep.mubr.f32.mxu0 %v2344
  %2488 = vmatmul.mubr.f32.gmra.mxu0 %v2343
  %v2489 = vpop.f32.mrf.mxu0
  %v2490 = vadd.f32 0.0, %v2489
  %v2491 = vpop.f32.mrf.mxu0
  %2492 = vmatprep.mubr.f32.mxu0 %v2349
  %2493 = vmatmul.mubr.f32.gmra.mxu0 %v2348
  %v2494 = vpop.f32.mrf.mxu0
  %v2495 = vadd.f32 0.0, %v2494
  %v2496 = vpop.f32.mrf.mxu0
  %2497 = vmatprep.mubr.f32.mxu0 %v2354
  %2498 = vmatmul.mubr.f32.gmra.mxu0 %v2353
  %v2499 = vpop.f32.mrf.mxu0
  %v2500 = vadd.f32 0.0, %v2499
  %v2501 = vpop.f32.mrf.mxu0
  %2502 = vmatprep.mubr.f32.mxu0 %v2359
  %2503 = vmatmul.mubr.f32.gmra.mxu0 %v2358
  %v2504 = vpop.f32.mrf.mxu0
  %v2505 = vadd.f32 0.0, %v2504
  %v2506 = vpop.f32.mrf.mxu0
  %2507 = vmatprep.mubr.f32.mxu0 %v2364
  %2508 = vmatmul.mubr.f32.gmra.mxu0 %v2363
  %v2509 = vpop.f32.mrf.mxu0
  %v2510 = vadd.f32 0.0, %v2509
  %v2511 = vpop.f32.mrf.mxu0
  %2512 = vmatprep.mubr.f32.mxu0 %v2369
  %2513 = vmatmul.mubr.f32.gmra.mxu0 %v2368
  %v2514 = vpop.f32.mrf.mxu0
  %v2515 = vadd.f32 0.0, %v2514
  %v2516 = vpop.f32.mrf.mxu0
  %2517 = vmatprep.mubr.f32.mxu0 %v2374
  %2518 = vmatmul.mubr.f32.gmra.mxu0 %v2373
  %v2519 = vpop.f32.mrf.mxu0
  %v2520 = vadd.f32 0.0, %v2519
  %v2521 = vpop.f32.mrf.mxu0
  %2522 = vmatprep.mubr.f32.mxu0 %v2379
  %2523 = vmatmul.mubr.f32.gmra.mxu0 %v2378
  %v2524 = vpop.f32.mrf.mxu0
  %v2525 = vadd.f32 0.0, %v2524
  %v2526 = vpop.f32.mrf.mxu0
  %2527 = vmatprep.mubr.f32.mxu0 %v2384
  %2528 = vmatmul.mubr.f32.gmra.mxu0 %v2383
  %v2529 = vpop.f32.mrf.mxu0
  %v2530 = vadd.f32 0.0, %v2529
  %v2531 = vpop.f32.mrf.mxu0
  %2532 = vmatprep.mubr.f32.mxu0 %v2389
  %2533 = vmatmul.mubr.f32.gmra.mxu0 %v2388
  %v2534 = vpop.f32.mrf.mxu0
  %v2535 = vadd.f32 0.0, %v2534
  %v2536 = vpop.f32.mrf.mxu0
  %2537 = vmatprep.mubr.f32.mxu0 %v2394
  %2538 = vmatmul.mubr.f32.gmra.mxu0 %v2393
  %v2539 = vpop.f32.mrf.mxu0
  %v2540 = vadd.f32 0.0, %v2539
  %v2541 = vpop.f32.mrf.mxu0
  %2542 = vmatprep.mubr.f32.mxu0 %v2399
  %2543 = vmatmul.mubr.f32.gmra.mxu0 %v2398
  %v2544 = vpop.f32.mrf.mxu0
  %v2545 = vadd.f32 0.0, %v2544
  %v2546 = vpop.f32.mrf.mxu0
  %2547 = vmatprep.mubr.f32.mxu0 %v2404
  %2548 = vmatmul.mubr.f32.gmra.mxu0 %v2403
  %v2549 = vpop.f32.mrf.mxu0
  %v2550 = vadd.f32 0.0, %v2549
  %v2551 = vpop.f32.mrf.mxu0
  %2552 = vmatprep.mubr.f32.mxu0 %v2409
  %2553 = vmatmul.mubr.f32.gmra.mxu0 %v2408
  %v2554 = vpop.f32.mrf.mxu0
  %v2555 = vadd.f32 0.0, %v2554
  %v2556 = vpop.f32.mrf.mxu0
  %2557 = vmatprep.mubr.f32.mxu0 %v2414
  %2558 = vmatmul.mubr.f32.gmra.mxu0 %v2413
  %v2559 = vpop.f32.mrf.mxu0
  %v2560 = vadd.f32 0.0, %v2559
  %v2561 = vpop.f32.mrf.mxu0
  %2562 = vdwg.mxu0
  %2563 = vmatprep.subr.mxu0 0.0
  %2564 = vmatpush1.msra.mxu0 %v2305
  %2565 = vmatprep.subr.mxu0 0.0
  %2566 = vmatpush1.msra.mxu0 %v2304
  %2567 = vmatprep.subr.mxu0 0.0
  %2568 = vmatpush1.msra.mxu0 %v2303
  %2569 = vmatprep.subr.mxu0 0.0
  %2570 = vmatpush1.msra.mxu0 %v2302
  %2571 = vmatprep.subr.mxu0 0.0
  %2572 = vmatpush1.msra.mxu0 %v2301
  %2573 = vmatprep.subr.mxu0 0.0
  %2574 = vmatpush1.msra.mxu0 %v2300
  %2575 = vmatprep.subr.mxu0 0.0
  %2576 = vmatpush1.msra.mxu0 %v2299
  %2577 = vmatprep.subr.mxu0 0.0
  %2578 = vmatpush1.msra.mxu0 %v2298
  %2579 = vmatprep.subr.mxu0 0.0
  %2580 = vmatpush1.msra.mxu0 %v2297
  %2581 = vmatprep.subr.mxu0 0.0
  %2582 = vmatpush1.msra.mxu0 %v2296
  %2583 = vmatprep.subr.mxu0 0.0
  %2584 = vmatpush1.msra.mxu0 %v2295
  %2585 = vmatprep.subr.mxu0 0.0
  %2586 = vmatpush1.msra.mxu0 %v2294
  %2587 = vmatprep.subr.mxu0 0.0
  %2588 = vmatpush1.msra.mxu0 %v2293
  %2589 = vmatprep.subr.mxu0 0.0
  %2590 = vmatpush1.msra.mxu0 %v2292
  %2591 = vmatprep.subr.mxu0 0.0
  %2592 = vmatpush1.msra.mxu0 %v2291
  %2593 = vmatprep.subr.mxu0 0.0
  %2594 = vmatpush1.msra.mxu0 %v2290
  %2595 = vmatprep.subr.mxu0 0.0
  %2596 = vmatpush2.msra.mxu0 %v2321
  %2597 = vmatprep.subr.mxu0 0.0
  %2598 = vmatpush2.msra.mxu0 %v2320
  %2599 = vmatprep.subr.mxu0 0.0
  %2600 = vmatpush2.msra.mxu0 %v2319
  %2601 = vmatprep.subr.mxu0 0.0
  %2602 = vmatpush2.msra.mxu0 %v2318
  %2603 = vmatprep.subr.mxu0 0.0
  %2604 = vmatpush2.msra.mxu0 %v2317
  %2605 = vmatprep.subr.mxu0 0.0
  %2606 = vmatpush2.msra.mxu0 %v2316
  %2607 = vmatprep.subr.mxu0 0.0
  %2608 = vmatpush2.msra.mxu0 %v2315
  %2609 = vmatprep.subr.mxu0 0.0
  %2610 = vmatpush2.msra.mxu0 %v2314
  %2611 = vmatprep.subr.mxu0 0.0
  %2612 = vmatpush2.msra.mxu0 %v2313
  %2613 = vmatprep.subr.mxu0 0.0
  %2614 = vmatpush2.msra.mxu0 %v2312
  %2615 = vmatprep.subr.mxu0 0.0
  %2616 = vmatpush2.msra.mxu0 %v2311
  %2617 = vmatprep.subr.mxu0 0.0
  %2618 = vmatpush2.msra.mxu0 %v2310
  %2619 = vmatprep.subr.mxu0 0.0
  %2620 = vmatpush2.msra.mxu0 %v2309
  %2621 = vmatprep.subr.mxu0 0.0
  %2622 = vmatpush2.msra.mxu0 %v2308
  %2623 = vmatprep.subr.mxu0 0.0
  %2624 = vmatpush2.msra.mxu0 %v2307
  %2625 = vmatprep.subr.mxu0 0.0
  %2626 = vmatpush2.msra.mxu0 %v2306
  %2627 = vmatprep.mubr.f32.mxu0 %v2341
  %2628 = vmatmul.mubr.f32.gmra.mxu0 %v2340
  %v2629 = vpop.f32.mrf.mxu0
  %v2630 = vadd.f32 %v2485, %v2629
  %v2631 = vpop.f32.mrf.mxu0
  %2632 = vmatprep.mubr.f32.mxu0 %v2346
  %2633 = vmatmul.mubr.f32.gmra.mxu0 %v2345
  %v2634 = vpop.f32.mrf.mxu0
  %v2635 = vadd.f32 %v2490, %v2634
  %v2636 = vpop.f32.mrf.mxu0
  %2637 = vmatprep.mubr.f32.mxu0 %v2351
  %2638 = vmatmul.mubr.f32.gmra.mxu0 %v2350
  %v2639 = vpop.f32.mrf.mxu0
  %v2640 = vadd.f32 %v2495, %v2639
  %v2641 = vpop.f32.mrf.mxu0
  %2642 = vmatprep.mubr.f32.mxu0 %v2356
  %2643 = vmatmul.mubr.f32.gmra.mxu0 %v2355
  %v2644 = vpop.f32.mrf.mxu0
  %v2645 = vadd.f32 %v2500, %v2644
  %v2646 = vpop.f32.mrf.mxu0
  %2647 = vmatprep.mubr.f32.mxu0 %v2361
  %2648 = vmatmul.mubr.f32.gmra.mxu0 %v2360
  %v2649 = vpop.f32.mrf.mxu0
  %v2650 = vadd.f32 %v2505, %v2649
  %v2651 = vpop.f32.mrf.mxu0
  %2652 = vmatprep.mubr.f32.mxu0 %v2366
  %2653 = vmatmul.mubr.f32.gmra.mxu0 %v2365
  %v2654 = vpop.f32.mrf.mxu0
  %v2655 = vadd.f32 %v2510, %v2654
  %v2656 = vpop.f32.mrf.mxu0
  %2657 = vmatprep.mubr.f32.mxu0 %v2371
  %2658 = vmatmul.mubr.f32.gmra.mxu0 %v2370
  %v2659 = vpop.f32.mrf.mxu0
  %v2660 = vadd.f32 %v2515, %v2659
  %v2661 = vpop.f32.mrf.mxu0
  %2662 = vmatprep.mubr.f32.mxu0 %v2376
  %2663 = vmatmul.mubr.f32.gmra.mxu0 %v2375
  %v2664 = vpop.f32.mrf.mxu0
  %v2665 = vadd.f32 %v2520, %v2664
  %v2666 = vpop.f32.mrf.mxu0
  %2667 = vmatprep.mubr.f32.mxu0 %v2381
  %2668 = vmatmul.mubr.f32.gmra.mxu0 %v2380
  %v2669 = vpop.f32.mrf.mxu0
  %v2670 = vadd.f32 %v2525, %v2669
  %v2671 = vpop.f32.mrf.mxu0
  %2672 = vmatprep.mubr.f32.mxu0 %v2386
  %2673 = vmatmul.mubr.f32.gmra.mxu0 %v2385
  %v2674 = vpop.f32.mrf.mxu0
  %v2675 = vadd.f32 %v2530, %v2674
  %v2676 = vpop.f32.mrf.mxu0
  %2677 = vmatprep.mubr.f32.mxu0 %v2391
  %2678 = vmatmul.mubr.f32.gmra.mxu0 %v2390
  %v2679 = vpop.f32.mrf.mxu0
  %v2680 = vadd.f32 %v2535, %v2679
  %v2681 = vpop.f32.mrf.mxu0
  %2682 = vmatprep.mubr.f32.mxu0 %v2396
  %2683 = vmatmul.mubr.f32.gmra.mxu0 %v2395
  %v2684 = vpop.f32.mrf.mxu0
  %v2685 = vadd.f32 %v2540, %v2684
  %v2686 = vpop.f32.mrf.mxu0
  %2687 = vmatprep.mubr.f32.mxu0 %v2401
  %2688 = vmatmul.mubr.f32.gmra.mxu0 %v2400
  %v2689 = vpop.f32.mrf.mxu0
  %v2690 = vadd.f32 %v2545, %v2689
  %v2691 = vpop.f32.mrf.mxu0
  %2692 = vmatprep.mubr.f32.mxu0 %v2406
  %2693 = vmatmul.mubr.f32.gmra.mxu0 %v2405
  %v2694 = vpop.f32.mrf.mxu0
  %v2695 = vadd.f32 %v2550, %v2694
  %v2696 = vpop.f32.mrf.mxu0
  %2697 = vmatprep.mubr.f32.mxu0 %v2411
  %2698 = vmatmul.mubr.f32.gmra.mxu0 %v2410
  %v2699 = vpop.f32.mrf.mxu0
  %v2700 = vadd.f32 %v2555, %v2699
  %v2701 = vpop.f32.mrf.mxu0
  %2702 = vmatprep.mubr.f32.mxu0 %v2416
  %2703 = vmatmul.mubr.f32.gmra.mxu0 %v2415
  %v2704 = vpop.f32.mrf.mxu0
  %v2705 = vadd.f32 %v2560, %v2704
  %v2706 = vpop.f32.mrf.mxu0
  %2707 = vdwg.mxu0
  %2708 = vmatprep.subr.mxu0 0.0
  %2709 = vmatpush1.msra.mxu0 %v2337
  %2710 = vmatprep.subr.mxu0 0.0
  %2711 = vmatpush1.msra.mxu0 %v2336
  %2712 = vmatprep.subr.mxu0 0.0
  %2713 = vmatpush1.msra.mxu0 %v2335
  %2714 = vmatprep.subr.mxu0 0.0
  %2715 = vmatpush1.msra.mxu0 %v2334
  %2716 = vmatprep.subr.mxu0 0.0
  %2717 = vmatpush1.msra.mxu0 %v2333
  %2718 = vmatprep.subr.mxu0 0.0
  %2719 = vmatpush1.msra.mxu0 %v2332
  %2720 = vmatprep.subr.mxu0 0.0
  %2721 = vmatpush1.msra.mxu0 %v2331
  %2722 = vmatprep.subr.mxu0 0.0
  %2723 = vmatpush1.msra.mxu0 %v2330
  %2724 = vmatprep.subr.mxu0 0.0
  %2725 = vmatpush1.msra.mxu0 %v2329
  %2726 = vmatprep.subr.mxu0 0.0
  %2727 = vmatpush1.msra.mxu0 %v2328
  %2728 = vmatprep.subr.mxu0 0.0
  %2729 = vmatpush1.msra.mxu0 %v2327
  %2730 = vmatprep.subr.mxu0 0.0
  %2731 = vmatpush1.msra.mxu0 %v2326
  %2732 = vmatprep.subr.mxu0 0.0
  %2733 = vmatpush1.msra.mxu0 %v2325
  %2734 = vmatprep.subr.mxu0 0.0
  %2735 = vmatpush1.msra.mxu0 %v2324
  %2736 = vmatprep.subr.mxu0 0.0
  %2737 = vmatpush1.msra.mxu0 %v2323
  %2738 = vmatprep.subr.mxu0 0.0
  %2739 = vmatpush1.msra.mxu0 %v2322
  %2740 = vmatprep.subr.mxu0 0.0
  %2741 = vmatpush2.msra.mxu0 0.0
  %2742 = vmatprep.subr.mxu0 0.0
  %2743 = vmatpush2.msra.mxu0 0.0
  %2744 = vmatprep.subr.mxu0 0.0
  %2745 = vmatpush2.msra.mxu0 0.0
  %2746 = vmatprep.subr.mxu0 0.0
  %2747 = vmatpush2.msra.mxu0 0.0
  %2748 = vmatprep.subr.mxu0 0.0
  %2749 = vmatpush2.msra.mxu0 0.0
  %2750 = vmatprep.subr.mxu0 0.0
  %2751 = vmatpush2.msra.mxu0 0.0
  %2752 = vmatprep.subr.mxu0 0.0
  %2753 = vmatpush2.msra.mxu0 0.0
  %2754 = vmatprep.subr.mxu0 0.0
  %2755 = vmatpush2.msra.mxu0 0.0
  %2756 = vmatprep.subr.mxu0 0.0
  %2757 = vmatpush2.msra.mxu0 0.0
  %2758 = vmatprep.subr.mxu0 0.0
  %2759 = vmatpush2.msra.mxu0 0.0
  %2760 = vmatprep.subr.mxu0 0.0
  %2761 = vmatpush2.msra.mxu0 0.0
  %2762 = vmatprep.subr.mxu0 0.0
  %2763 = vmatpush2.msra.mxu0 0.0
  %2764 = vmatprep.subr.mxu0 0.0
  %2765 = vmatpush2.msra.mxu0 0.0
  %2766 = vmatprep.subr.mxu0 0.0
  %2767 = vmatpush2.msra.mxu0 0.0
  %2768 = vmatprep.subr.mxu0 0.0
  %2769 = vmatpush2.msra.mxu0 0.0
  %2770 = vmatprep.subr.mxu0 0.0
  %2771 = vmatpush2.msra.mxu0 0.0
  %2772 = vmatprep.mubr.f32.mxu0 0.0
  %2773 = vmatmul.mubr.f32.gmra.mxu0 %v2342
  %v2774 = vpop.f32.mrf.mxu0
  %v2775 = vadd.f32 %v2630, %v2774
  %v2776 = vpop.f32.mrf.mxu0
  %2777 = vmatprep.mubr.f32.mxu0 0.0
  %2778 = vmatmul.mubr.f32.gmra.mxu0 %v2347
  %v2779 = vpop.f32.mrf.mxu0
  %v2780 = vadd.f32 %v2635, %v2779
  %v2781 = vpop.f32.mrf.mxu0
  %2782 = vmatprep.mubr.f32.mxu0 0.0
  %2783 = vmatmul.mubr.f32.gmra.mxu0 %v2352
  %v2784 = vpop.f32.mrf.mxu0
  %v2785 = vadd.f32 %v2640, %v2784
  %v2786 = vpop.f32.mrf.mxu0
  %2787 = vmatprep.mubr.f32.mxu0 0.0
  %2788 = vmatmul.mubr.f32.gmra.mxu0 %v2357
  %v2789 = vpop.f32.mrf.mxu0
  %v2790 = vadd.f32 %v2645, %v2789
  %v2791 = vpop.f32.mrf.mxu0
  %2792 = vmatprep.mubr.f32.mxu0 0.0
  %2793 = vmatmul.mubr.f32.gmra.mxu0 %v2362
  %v2794 = vpop.f32.mrf.mxu0
  %v2795 = vadd.f32 %v2650, %v2794
  %v2796 = vpop.f32.mrf.mxu0
  %2797 = vmatprep.mubr.f32.mxu0 0.0
  %2798 = vmatmul.mubr.f32.gmra.mxu0 %v2367
  %v2799 = vpop.f32.mrf.mxu0
  %v2800 = vadd.f32 %v2655, %v2799
  %v2801 = vpop.f32.mrf.mxu0
  %2802 = vmatprep.mubr.f32.mxu0 0.0
  %2803 = vmatmul.mubr.f32.gmra.mxu0 %v2372
  %v2804 = vpop.f32.mrf.mxu0
  %v2805 = vadd.f32 %v2660, %v2804
  %v2806 = vpop.f32.mrf.mxu0
  %2807 = vmatprep.mubr.f32.mxu0 0.0
  %2808 = vmatmul.mubr.f32.gmra.mxu0 %v2377
  %v2809 = vpop.f32.mrf.mxu0
  %v2810 = vadd.f32 %v2665, %v2809
  %v2811 = vpop.f32.mrf.mxu0
  %2812 = vmatprep.mubr.f32.mxu0 0.0
  %2813 = vmatmul.mubr.f32.gmra.mxu0 %v2382
  %v2814 = vpop.f32.mrf.mxu0
  %v2815 = vadd.f32 %v2670, %v2814
  %v2816 = vpop.f32.mrf.mxu0
  %2817 = vmatprep.mubr.f32.mxu0 0.0
  %2818 = vmatmul.mubr.f32.gmra.mxu0 %v2387
  %v2819 = vpop.f32.mrf.mxu0
  %v2820 = vadd.f32 %v2675, %v2819
  %v2821 = vpop.f32.mrf.mxu0
  %2822 = vmatprep.mubr.f32.mxu0 0.0
  %2823 = vmatmul.mubr.f32.gmra.mxu0 %v2392
  %v2824 = vpop.f32.mrf.mxu0
  %v2825 = vadd.f32 %v2680, %v2824
  %v2826 = vpop.f32.mrf.mxu0
  %2827 = vmatprep.mubr.f32.mxu0 0.0
  %2828 = vmatmul.mubr.f32.gmra.mxu0 %v2397
  %v2829 = vpop.f32.mrf.mxu0
  %v2830 = vadd.f32 %v2685, %v2829
  %v2831 = vpop.f32.mrf.mxu0
  %2832 = vmatprep.mubr.f32.mxu0 0.0
  %2833 = vmatmul.mubr.f32.gmra.mxu0 %v2402
  %v2834 = vpop.f32.mrf.mxu0
  %v2835 = vadd.f32 %v2690, %v2834
  %v2836 = vpop.f32.mrf.mxu0
  %2837 = vmatprep.mubr.f32.mxu0 0.0
  %2838 = vmatmul.mubr.f32.gmra.mxu0 %v2407
  %v2839 = vpop.f32.mrf.mxu0
  %v2840 = vadd.f32 %v2695, %v2839
  %v2841 = vpop.f32.mrf.mxu0
  %2842 = vmatprep.mubr.f32.mxu0 0.0
  %2843 = vmatmul.mubr.f32.gmra.mxu0 %v2412
  %v2844 = vpop.f32.mrf.mxu0
  %v2845 = vadd.f32 %v2700, %v2844
  %v2846 = vpop.f32.mrf.mxu0
  %2847 = vmatprep.mubr.f32.mxu0 0.0
  %2848 = vmatmul.mubr.f32.gmra.mxu0 %v2417
  %v2849 = vpop.f32.mrf.mxu0
  %v2850 = vadd.f32 %v2705, %v2849
  %v2851 = vpop.f32.mrf.mxu0
  %2852 = vdwg.mxu0
  %2853 = vst.msk [vmem:[%s4] sm:$0xff] %vm97, %v2775
  %2854 = vst.msk [vmem:[%s4 + $0x8] sm:$0xff] %vm97, %v2780
  %2855 = vst.msk [vmem:[%s4 + $0x10] sm:$0xff] %vm97, %v2785
  %2856 = vst.msk [vmem:[%s4 + $0x18] sm:$0xff] %vm97, %v2790
  %2857 = vst.msk [vmem:[%s4 + $0x20] sm:$0xff] %vm97, %v2795
  %2858 = vst.msk [vmem:[%s4 + $0x28] sm:$0xff] %vm97, %v2800
  %2859 = vst.msk [vmem:[%s4 + $0x30] sm:$0xff] %vm97, %v2805
  %2860 = vst.msk [vmem:[%s4 + $0x38] sm:$0xff] %vm97, %v2810
  %2861 = vst.msk [vmem:[%s4 + $0x40] sm:$0xff] %vm97, %v2815
  %2862 = vst.msk [vmem:[%s4 + $0x48] sm:$0xff] %vm97, %v2820
  %2863 = vst.msk [vmem:[%s4 + $0x50] sm:$0xff] %vm97, %v2825
  %2864 = vst.msk [vmem:[%s4 + $0x58] sm:$0xff] %vm97, %v2830
  %2865 = vst.msk [vmem:[%s4 + $0x60] sm:$0xff] %vm97, %v2835
  %2866 = vst.msk [vmem:[%s4 + $0x68] sm:$0xff] %vm97, %v2840
  %2867 = vst.msk [vmem:[%s4 + $0x70] sm:$0xff] %vm97, %v2845
  %2868 = vst.msk [vmem:[%s4 + $0x78] sm:$0xff] %vm97, %v2850
  // Predicated region
  $region18: #{tpu_custom_call.1} parent=0 // pred_check
    _
  $region19: #{tpu_custom_call.1} parent=0 // pred_check_branch
    %2870 = sbr.rel (0) target = $region21
  $region20: #{tpu_custom_call.1} parent=0 // pred_region
    _
  $region21: #{tpu_custom_call.1} parent=0 // pred_fallthru
    _
  // Predicated region
  $region22: #{tpu_custom_call.1} parent=0 // pred_check
    _
  $region23: #{tpu_custom_call.1} parent=0 // pred_check_branch
    %2872 = sbr.rel (0) target = $region25
  $region24: #{tpu_custom_call.1} parent=0 // pred_region
    _
  $region25: #{tpu_custom_call.1} parent=0 // pred_fallthru
    _

</llo_original>
